<compile_context>
chip_gen: v6e
topology: v6e:2x2x1
jax: 0.10.0
libtpu: 0.0.40
codegen_flags: <defaults>
</compile_context>

<pallas_src>
import functools

import jax
import jax.numpy as jnp
from jax.experimental import pallas as pl
from jax.experimental.pallas import tpu as pltpu


def mha_kernel(xq_ref, xk_ref, xv_ref,
               wq_ref, bq_ref, wk_ref, bk_ref, wv_ref, bv_ref,
               wo_ref, bo_ref, out_ref, *, n_heads, head_dim):
    f32 = jnp.float32
    bf16 = jnp.bfloat16
    S = xq_ref.shape[0]
    H, hd = n_heads, head_dim

    # In-kernel f32 -> bf16 cast of the activation blocks (VPU), then the
    # three projections as full-width MXU matmuls with f32 accumulation.
    # 1/sqrt(head_dim) is already folded into wq/bq by the wrapper.
    xq = xq_ref[...].astype(bf16)
    xk = xk_ref[...].astype(bf16)
    xv = xv_ref[...].astype(bf16)

    Q = jnp.dot(xq, wq_ref[...], preferred_element_type=f32) + bq_ref[...]
    K = jnp.dot(xk, wk_ref[...], preferred_element_type=f32) + bk_ref[...]
    V = jnp.dot(xv, wv_ref[...], preferred_element_type=f32) + bv_ref[...]

    # (S, D) -> (H, S, hd): single relayout per operand, then head-batched
    # attention (no per-head Python loop, no narrow lane slices).
    def to_heads(x):
        return jnp.swapaxes(x.astype(bf16).reshape(S, H, hd), 0, 1)

    Qh = to_heads(Q)                                   # (H, S, hd) bf16 (pre-scaled)
    Kh = to_heads(K)                                   # (H, S, hd) bf16
    Vh = to_heads(V)                                   # (H, S, hd) bf16

    # scores[h, q, k] = sum_d Qh[h, q, d] * Kh[h, k, d]   (no K transpose)
    s = jnp.einsum('hqd,hkd->hqk', Qh, Kh,
                   preferred_element_type=f32)          # (H, S, S) f32
    m = jnp.max(s, axis=-1, keepdims=True)
    p = jnp.exp(s - m)
    w = p * pl.reciprocal(jnp.sum(p, axis=-1, keepdims=True), approx=True)

    ctx = jnp.einsum('hqk,hkd->hqd', w.astype(bf16), Vh,
                     preferred_element_type=f32)        # (H, S, hd) f32

    # (H, S, hd) -> (S, D) for the lane-dense output projection / store.
    ctx_sd = jnp.swapaxes(ctx.astype(bf16), 0, 1).reshape(S, H * hd)

    out = jnp.dot(ctx_sd, wo_ref[...], preferred_element_type=f32) + bo_ref[...]
    out_ref[...] = out.astype(out_ref.dtype)


def mha_pallas(q, k, v, params, *, n_heads):
    B, S, D = q.shape
    head_dim = D // n_heads
    inv_scale = 1.0 / (float(head_dim) ** 0.5)

    wq, bq, wk, bk, wv, bv, wo, bo = params
    # PyTorch (out, in) -> (in, out); fold the 1/sqrt(hd) attention scale into
    # the Q projection; weights bf16 for the MXU, biases f32.
    wq_t = (wq.T * inv_scale).astype(jnp.bfloat16)
    wk_t = wk.T.astype(jnp.bfloat16)
    wv_t = wv.T.astype(jnp.bfloat16)
    wo_t = wo.T.astype(jnp.bfloat16)
    bq2 = (bq * inv_scale).reshape(1, D).astype(jnp.float32)
    bk2 = bk.reshape(1, D).astype(jnp.float32)
    bv2 = bv.reshape(1, D).astype(jnp.float32)
    bo2 = bo.reshape(1, D).astype(jnp.float32)

    kernel = functools.partial(mha_kernel, n_heads=n_heads, head_dim=head_dim)

    # One batch element per grid step; leading dim squeezed out of the kernel
    # refs.  Weights/biases get constant index maps (VMEM-resident).
    x_spec = pl.BlockSpec((None, S, D), lambda b: (b, 0, 0))
    w_spec = pl.BlockSpec((D, D), lambda b: (0, 0))
    b_spec = pl.BlockSpec((1, D), lambda b: (0, 0))

    out = pl.pallas_call(
        kernel,
        out_shape=jax.ShapeDtypeStruct((B, S, D), q.dtype),
        grid_spec=pltpu.PrefetchScalarGridSpec(
            num_scalar_prefetch=0,
            grid=(B,),
            in_specs=[x_spec, x_spec, x_spec,
                      w_spec, b_spec, w_spec, b_spec,
                      w_spec, b_spec, w_spec, b_spec],
            out_specs=x_spec,
        ),
        compiler_params=pltpu.CompilerParams(
            dimension_semantics=("parallel",)),
    )(q, k, v, wq_t, bq2, wk_t, bk2, wv_t, bv2, wo_t, bo2)
    return out


def mha_reference(q, k, v, params, *, n_heads):
    """Pure-JAX f32 reference mirroring the PyTorch forward."""
    B, S, D = q.shape
    hd = D // n_heads
    wq, bq, wk, bk, wv, bv, wo, bo = params
    Q = q @ wq.T + bq
    K = k @ wk.T + bk
    V = v @ wv.T + bv

    def split(x):  # b s (h d) -> b h s d
        return x.reshape(B, S, n_heads, hd).transpose(0, 2, 1, 3)

    Qh, Kh, Vh = split(Q), split(K), split(V)
    s = jnp.einsum("bhqd,bhkd->bhqk", Qh, Kh) / (float(hd) ** 0.5)
    w = jax.nn.softmax(s, axis=-1)
    a = jnp.einsum("bhqk,bhkd->bhqd", w, Vh)
    x = a.transpose(0, 2, 1, 3).reshape(B, S, D)
    return x @ wo.T + bo


if __name__ == "__main__":
    B, S, D, H = 2, 8, 32, 4

    key = jax.random.PRNGKey(0)
    keys = jax.random.split(key, 12)
    bound = 1.0 / (D ** 0.5)   # PyTorch nn.Linear default init range

    def init_w(k):
        return jax.random.uniform(k, (D, D), jnp.float32, -bound, bound)

    def init_b(k):
        return jax.random.uniform(k, (D,), jnp.float32, -bound, bound)

    params = (init_w(keys[0]), init_b(keys[1]),   # q
              init_w(keys[2]), init_b(keys[3]),   # k
              init_w(keys[4]), init_b(keys[5]),   # v
              init_w(keys[6]), init_b(keys[7]))   # o

    q = jax.random.normal(keys[8], (B, S, D), jnp.float32)
    k = jax.random.normal(keys[9], (B, S, D), jnp.float32)
    v = jax.random.normal(keys[10], (B, S, D), jnp.float32)

    out = mha_pallas(q, k, v, params, n_heads=H)
    jax.block_until_ready(out)

    ref = mha_reference(q, k, v, params, n_heads=H)
    assert out.shape == (B, S, D)
    # Tolerance loosened for bf16 MXU inputs + approximate reciprocal.
    assert jnp.allclose(out, ref, atol=5e-2, rtol=5e-2), (
        float(jnp.max(jnp.abs(out - ref))))
    print("KERNEL_OK")
</pallas_src>

<mosaic_0001>
module attributes {stable_mosaic.version = 11 : i64} {
  func.func @mha_kernel(%arg0: i32, %arg1: memref<1x8x32xf32, #tpu.memory_space<vmem>>, %arg2: memref<1x8x32xf32, #tpu.memory_space<vmem>>, %arg3: memref<1x8x32xf32, #tpu.memory_space<vmem>>, %arg4: memref<32x32xbf16, #tpu.memory_space<vmem>>, %arg5: memref<1x32xf32, #tpu.memory_space<vmem>>, %arg6: memref<32x32xbf16, #tpu.memory_space<vmem>>, %arg7: memref<1x32xf32, #tpu.memory_space<vmem>>, %arg8: memref<32x32xbf16, #tpu.memory_space<vmem>>, %arg9: memref<1x32xf32, #tpu.memory_space<vmem>>, %arg10: memref<32x32xbf16, #tpu.memory_space<vmem>>, %arg11: memref<1x32xf32, #tpu.memory_space<vmem>>, %arg12: memref<1x8x32xf32, #tpu.memory_space<vmem>>) attributes {dimension_semantics = [#tpu.dimension_semantics<parallel>], iteration_bounds = array<i64: 2>, scalar_prefetch = 0 : i64, scratch_operands = 0 : i64, tpu.core_type = #tpu.core_type<tc>, window_params = [{transform_indices = @transform_0, window_bounds = array<i64: 1, 8, 32>}, {transform_indices = @transform_1, window_bounds = array<i64: 1, 8, 32>}, {transform_indices = @transform_2, window_bounds = array<i64: 1, 8, 32>}, {pipeline_mode = #tpu.pipeline_mode<synchronous>, transform_indices = @transform_3, window_bounds = array<i64: 32, 32>}, {pipeline_mode = #tpu.pipeline_mode<synchronous>, transform_indices = @transform_4, window_bounds = array<i64: 1, 32>}, {pipeline_mode = #tpu.pipeline_mode<synchronous>, transform_indices = @transform_5, window_bounds = array<i64: 32, 32>}, {pipeline_mode = #tpu.pipeline_mode<synchronous>, transform_indices = @transform_6, window_bounds = array<i64: 1, 32>}, {pipeline_mode = #tpu.pipeline_mode<synchronous>, transform_indices = @transform_7, window_bounds = array<i64: 32, 32>}, {pipeline_mode = #tpu.pipeline_mode<synchronous>, transform_indices = @transform_8, window_bounds = array<i64: 1, 32>}, {pipeline_mode = #tpu.pipeline_mode<synchronous>, transform_indices = @transform_9, window_bounds = array<i64: 32, 32>}, {pipeline_mode = #tpu.pipeline_mode<synchronous>, transform_indices = @transform_10, window_bounds = array<i64: 1, 32>}, {transform_indices = @transform_11, window_bounds = array<i64: 1, 8, 32>}]} {
    %c0 = arith.constant 0 : index
    %c0_0 = arith.constant 0 : index
    %c0_1 = arith.constant 0 : index
    %0 = vector.load %arg1[%c0, %c0_0, %c0_1] : memref<1x8x32xf32, #tpu.memory_space<vmem>>, vector<1x8x32xf32>
    %1 = vector.shape_cast %0 : vector<1x8x32xf32> to vector<8x32xf32>
    %2 = arith.truncf %1 : vector<8x32xf32> to vector<8x32xbf16>
    %c0_2 = arith.constant 0 : index
    %c0_3 = arith.constant 0 : index
    %c0_4 = arith.constant 0 : index
    %3 = vector.load %arg2[%c0_2, %c0_3, %c0_4] : memref<1x8x32xf32, #tpu.memory_space<vmem>>, vector<1x8x32xf32>
    %4 = vector.shape_cast %3 : vector<1x8x32xf32> to vector<8x32xf32>
    %5 = arith.truncf %4 : vector<8x32xf32> to vector<8x32xbf16>
    %c0_5 = arith.constant 0 : index
    %c0_6 = arith.constant 0 : index
    %c0_7 = arith.constant 0 : index
    %6 = vector.load %arg3[%c0_5, %c0_6, %c0_7] : memref<1x8x32xf32, #tpu.memory_space<vmem>>, vector<1x8x32xf32>
    %7 = vector.shape_cast %6 : vector<1x8x32xf32> to vector<8x32xf32>
    %8 = arith.truncf %7 : vector<8x32xf32> to vector<8x32xbf16>
    %c0_8 = arith.constant 0 : index
    %c0_9 = arith.constant 0 : index
    %9 = vector.load %arg4[%c0_8, %c0_9] : memref<32x32xbf16, #tpu.memory_space<vmem>>, vector<32x32xbf16>
    %cst = arith.constant dense<0.000000e+00> : vector<8x32xf32>
    %10 = tpu.matmul %2, %9, %cst {dimension_numbers = #tpu.dot_dimension_numbers<[1], [0], [0], [1], [0, 0, 1, 1], [], []>} : vector<8x32xbf16>, vector<32x32xbf16>, vector<8x32xf32> -> vector<8x32xf32>
    %c0_10 = arith.constant 0 : index
    %c0_11 = arith.constant 0 : index
    %11 = vector.load %arg5[%c0_10, %c0_11] : memref<1x32xf32, #tpu.memory_space<vmem>>, vector<1x32xf32>
    %12 = vector.broadcast %11 : vector<1x32xf32> to vector<8x32xf32>
    %13 = arith.addf %10, %12 : vector<8x32xf32>
    %c0_12 = arith.constant 0 : index
    %c0_13 = arith.constant 0 : index
    %14 = vector.load %arg6[%c0_12, %c0_13] : memref<32x32xbf16, #tpu.memory_space<vmem>>, vector<32x32xbf16>
    %cst_14 = arith.constant dense<0.000000e+00> : vector<8x32xf32>
    %15 = tpu.matmul %5, %14, %cst_14 {dimension_numbers = #tpu.dot_dimension_numbers<[1], [0], [0], [1], [0, 0, 1, 1], [], []>} : vector<8x32xbf16>, vector<32x32xbf16>, vector<8x32xf32> -> vector<8x32xf32>
    %c0_15 = arith.constant 0 : index
    %c0_16 = arith.constant 0 : index
    %16 = vector.load %arg7[%c0_15, %c0_16] : memref<1x32xf32, #tpu.memory_space<vmem>>, vector<1x32xf32>
    %17 = vector.broadcast %16 : vector<1x32xf32> to vector<8x32xf32>
    %18 = arith.addf %15, %17 : vector<8x32xf32>
    %c0_17 = arith.constant 0 : index
    %c0_18 = arith.constant 0 : index
    %19 = vector.load %arg8[%c0_17, %c0_18] : memref<32x32xbf16, #tpu.memory_space<vmem>>, vector<32x32xbf16>
    %cst_19 = arith.constant dense<0.000000e+00> : vector<8x32xf32>
    %20 = tpu.matmul %8, %19, %cst_19 {dimension_numbers = #tpu.dot_dimension_numbers<[1], [0], [0], [1], [0, 0, 1, 1], [], []>} : vector<8x32xbf16>, vector<32x32xbf16>, vector<8x32xf32> -> vector<8x32xf32>
    %c0_20 = arith.constant 0 : index
    %c0_21 = arith.constant 0 : index
    %21 = vector.load %arg9[%c0_20, %c0_21] : memref<1x32xf32, #tpu.memory_space<vmem>>, vector<1x32xf32>
    %22 = vector.broadcast %21 : vector<1x32xf32> to vector<8x32xf32>
    %23 = arith.addf %20, %22 : vector<8x32xf32>
    %24 = arith.truncf %13 : vector<8x32xf32> to vector<8x32xbf16>
    %25 = vector.shape_cast %24 : vector<8x32xbf16> to vector<8x4x8xbf16>
    %26 = tpu.transpose %25, [1, 0, 2] : vector<8x4x8xbf16> -> vector<4x8x8xbf16>
    %27 = arith.truncf %18 : vector<8x32xf32> to vector<8x32xbf16>
    %28 = vector.shape_cast %27 : vector<8x32xbf16> to vector<8x4x8xbf16>
    %29 = tpu.transpose %28, [1, 0, 2] : vector<8x4x8xbf16> -> vector<4x8x8xbf16>
    %30 = arith.truncf %23 : vector<8x32xf32> to vector<8x32xbf16>
    %31 = vector.shape_cast %30 : vector<8x32xbf16> to vector<8x4x8xbf16>
    %32 = tpu.transpose %31, [1, 0, 2] : vector<8x4x8xbf16> -> vector<4x8x8xbf16>
    "tpu.trace_start"() <{level = 10 : i32, message = "hqd,hkd->hqk"}> : () -> ()
    %cst_22 = arith.constant dense<0.000000e+00> : vector<4x8x8xf32>
    %33 = tpu.matmul %26, %29, %cst_22 {dimension_numbers = #tpu.dot_dimension_numbers<[2], [2], [1], [1], [0, 0, 0, 1, 1, 1], [0], [0]>} : vector<4x8x8xbf16>, vector<4x8x8xbf16>, vector<4x8x8xf32> -> vector<4x8x8xf32>
    "tpu.trace_stop"() : () -> ()
    %cst_23 = arith.constant dense<0xFF800000> : vector<4x8xf32>
    %34 = vector.multi_reduction <maximumf>, %33, %cst_23 [2] : vector<4x8x8xf32> to vector<4x8xf32>
    %35 = vector.shape_cast %34 : vector<4x8xf32> to vector<4x8x1xf32>
    %36 = vector.broadcast %35 : vector<4x8x1xf32> to vector<4x8x8xf32>
    %37 = arith.subf %33, %36 : vector<4x8x8xf32>
    %38 = math.exp %37 : vector<4x8x8xf32>
    %cst_24 = arith.constant dense<0.000000e+00> : vector<4x8xf32>
    %39 = vector.multi_reduction <add>, %38, %cst_24 [2] : vector<4x8x8xf32> to vector<4x8xf32>
    %40 = vector.shape_cast %39 : vector<4x8xf32> to vector<4x8x1xf32>
    %41 = tpu.reciprocal %40 {approx = true} : vector<4x8x1xf32> -> vector<4x8x1xf32>
    %42 = vector.broadcast %41 : vector<4x8x1xf32> to vector<4x8x8xf32>
    %43 = arith.mulf %38, %42 : vector<4x8x8xf32>
    %44 = arith.truncf %43 : vector<4x8x8xf32> to vector<4x8x8xbf16>
    "tpu.trace_start"() <{level = 10 : i32, message = "hqk,hkd->hqd"}> : () -> ()
    %cst_25 = arith.constant dense<0.000000e+00> : vector<4x8x8xf32>
    %45 = tpu.matmul %44, %32, %cst_25 {dimension_numbers = #tpu.dot_dimension_numbers<[2], [1], [1], [2], [0, 0, 0, 1, 1, 2], [0], [0]>} : vector<4x8x8xbf16>, vector<4x8x8xbf16>, vector<4x8x8xf32> -> vector<4x8x8xf32>
    "tpu.trace_stop"() : () -> ()
    %46 = arith.truncf %45 : vector<4x8x8xf32> to vector<4x8x8xbf16>
    %47 = tpu.transpose %46, [1, 0, 2] : vector<4x8x8xbf16> -> vector<8x4x8xbf16>
    %48 = vector.shape_cast %47 : vector<8x4x8xbf16> to vector<8x32xbf16>
    %c0_26 = arith.constant 0 : index
    %c0_27 = arith.constant 0 : index
    %49 = vector.load %arg10[%c0_26, %c0_27] : memref<32x32xbf16, #tpu.memory_space<vmem>>, vector<32x32xbf16>
    %cst_28 = arith.constant dense<0.000000e+00> : vector<8x32xf32>
    %50 = tpu.matmul %48, %49, %cst_28 {dimension_numbers = #tpu.dot_dimension_numbers<[1], [0], [0], [1], [0, 0, 1, 1], [], []>} : vector<8x32xbf16>, vector<32x32xbf16>, vector<8x32xf32> -> vector<8x32xf32>
    %c0_29 = arith.constant 0 : index
    %c0_30 = arith.constant 0 : index
    %51 = vector.load %arg11[%c0_29, %c0_30] : memref<1x32xf32, #tpu.memory_space<vmem>>, vector<1x32xf32>
    %52 = vector.broadcast %51 : vector<1x32xf32> to vector<8x32xf32>
    %53 = arith.addf %50, %52 : vector<8x32xf32>
    %c0_31 = arith.constant 0 : index
    %c0_32 = arith.constant 0 : index
    %c0_33 = arith.constant 0 : index
    %54 = vector.load %arg12[%c0_31, %c0_32, %c0_33] : memref<1x8x32xf32, #tpu.memory_space<vmem>>, vector<1x8x32xf32>
    %55 = vector.shape_cast %54 : vector<1x8x32xf32> to vector<8x32xf32>
    %56 = vector.shape_cast %53 : vector<8x32xf32> to vector<1x8x32xf32>
    tpu.vector_store %arg12[%c0_31, %c0_32, %c0_33], %56 {strides = array<i32>} : memref<1x8x32xf32, #tpu.memory_space<vmem>>, vector<1x8x32xf32>,
    return
  }
  func.func @transform_0(%arg0: i32) -> (i32, i32, i32) {
    %c0_i32 = arith.constant 0 : i32
    %c0_i32_0 = arith.constant 0 : i32
    %c0_i32_1 = arith.constant 0 : i32
    return %arg0, %c0_i32, %c0_i32_0 : i32, i32, i32
  }
  func.func @transform_1(%arg0: i32) -> (i32, i32, i32) {
    %c0_i32 = arith.constant 0 : i32
    %c0_i32_0 = arith.constant 0 : i32
    %c0_i32_1 = arith.constant 0 : i32
    return %arg0, %c0_i32, %c0_i32_0 : i32, i32, i32
  }
  func.func @transform_2(%arg0: i32) -> (i32, i32, i32) {
    %c0_i32 = arith.constant 0 : i32
    %c0_i32_0 = arith.constant 0 : i32
    %c0_i32_1 = arith.constant 0 : i32
    return %arg0, %c0_i32, %c0_i32_0 : i32, i32, i32
  }
  func.func @transform_3(%arg0: i32) -> (i32, i32) {
    %c0_i32 = arith.constant 0 : i32
    %c0_i32_0 = arith.constant 0 : i32
    %c0_i32_1 = arith.constant 0 : i32
    return %c0_i32, %c0_i32_0 : i32, i32
  }
  func.func @transform_4(%arg0: i32) -> (i32, i32) {
    %c0_i32 = arith.constant 0 : i32
    %c0_i32_0 = arith.constant 0 : i32
    %c0_i32_1 = arith.constant 0 : i32
    return %c0_i32, %c0_i32_0 : i32, i32
  }
  func.func @transform_5(%arg0: i32) -> (i32, i32) {
    %c0_i32 = arith.constant 0 : i32
    %c0_i32_0 = arith.constant 0 : i32
    %c0_i32_1 = arith.constant 0 : i32
    return %c0_i32, %c0_i32_0 : i32, i32
  }
  func.func @transform_6(%arg0: i32) -> (i32, i32) {
    %c0_i32 = arith.constant 0 : i32
    %c0_i32_0 = arith.constant 0 : i32
    %c0_i32_1 = arith.constant 0 : i32
    return %c0_i32, %c0_i32_0 : i32, i32
  }
  func.func @transform_7(%arg0: i32) -> (i32, i32) {
    %c0_i32 = arith.constant 0 : i32
    %c0_i32_0 = arith.constant 0 : i32
    %c0_i32_1 = arith.constant 0 : i32
    return %c0_i32, %c0_i32_0 : i32, i32
  }
  func.func @transform_8(%arg0: i32) -> (i32, i32) {
    %c0_i32 = arith.constant 0 : i32
    %c0_i32_0 = arith.constant 0 : i32
    %c0_i32_1 = arith.constant 0 : i32
    return %c0_i32, %c0_i32_0 : i32, i32
  }
  func.func @transform_9(%arg0: i32) -> (i32, i32) {
    %c0_i32 = arith.constant 0 : i32
    %c0_i32_0 = arith.constant 0 : i32
    %c0_i32_1 = arith.constant 0 : i32
    return %c0_i32, %c0_i32_0 : i32, i32
  }
  func.func @transform_10(%arg0: i32) -> (i32, i32) {
    %c0_i32 = arith.constant 0 : i32
    %c0_i32_0 = arith.constant 0 : i32
    %c0_i32_1 = arith.constant 0 : i32
    return %c0_i32, %c0_i32_0 : i32, i32
  }
  func.func @transform_11(%arg0: i32) -> (i32, i32, i32) {
    %c0_i32 = arith.constant 0 : i32
    %c0_i32_0 = arith.constant 0 : i32
    %c0_i32_1 = arith.constant 0 : i32
    return %arg0, %c0_i32, %c0_i32_0 : i32, i32, i32
  }
}

</mosaic_0001>

<llo_original>
// kernel: tpu_custom_call.1
$region0: #{tpu_custom_call.1}
  #allocation0 [shape = 'u32[]', space=smem, size = 0x4, offset = 0x4, fixed_abs, tag = 'smem constant byte address 0x4 - core index']
  #allocation1 [shape = 'u32[144,128]{1,0:T(1,128)}', space=vmem, size = 0x12000, scoped, tag = 'internal scratch']
  %s0 = inlined_call_operand.hbm [shape: f32[2,8,32], index: 0, kind: input, shape index: {}]
  %s1 = inlined_call_operand.hbm [shape: f32[2,8,32], index: 1, kind: input, shape index: {}]
  %s2 = inlined_call_operand.hbm [shape: f32[2,8,32], index: 2, kind: input, shape index: {}]
  %s3 = inlined_call_operand.hbm [shape: bf16[32,32], index: 3, kind: input, shape index: {}]
  %s4 = inlined_call_operand.hbm [shape: f32[1,32], index: 4, kind: input, shape index: {}]
  %s5 = inlined_call_operand.hbm [shape: bf16[32,32], index: 5, kind: input, shape index: {}]
  %s6 = inlined_call_operand.hbm [shape: f32[1,32], index: 6, kind: input, shape index: {}]
  %s7 = inlined_call_operand.hbm [shape: bf16[32,32], index: 7, kind: input, shape index: {}]
  %s8 = inlined_call_operand.hbm [shape: f32[1,32], index: 8, kind: input, shape index: {}]
  %s9 = inlined_call_operand.vmem [shape: bf16[32,32], index: 9, kind: input, shape index: {}]
  %s10 = inlined_call_operand.vmem [shape: f32[1,32], index: 10, kind: input, shape index: {}]
  %s11 = inlined_call_operand.hbm [shape: f32[2,8,32], index: 11, kind: output, shape index: {}]
  %s12 = sld [smem:[#allocation0]]
  $region113: #{tpu_custom_call.1} parent=0
    _
  %s14 = ssub.s32 1, %s12
  %s15 = scalar_select 0, %s14, %s12
  $region1: #{tpu_custom_call.1} parent=0
    #allocation2 [shape = 'u8[8192]{0}', space=vmem, size = 0x2000, scoped, tag = 'input window, operand 0']
    #allocation3 [shape = 's32[2]{0}', space=sflag, size = 0x8, scoped, tag = 'scoped memory for tpu_custom_call.1']
    #allocation4 [shape = 's32[2]{0}', space=sflag, size = 0x8, scoped, tag = 'scoped memory for tpu_custom_call.1']
    #allocation5 [shape = 'u8[8192]{0}', space=vmem, size = 0x2000, scoped, tag = 'input window, operand 1']
    #allocation6 [shape = 's32[2]{0}', space=sflag, size = 0x8, scoped, tag = 'scoped memory for tpu_custom_call.1']
    #allocation7 [shape = 'u8[8192]{0}', space=vmem, size = 0x2000, scoped, tag = 'input window, operand 2']
    #allocation8 [shape = 'u8[8192]{0}', space=vmem, size = 0x2000, scoped, tag = 'input window, operand 3, single buffered']
    #allocation9 [shape = 's32[1]{0}', space=sflag, size = 0x4, scoped, tag = 'scoped memory for tpu_custom_call.1']
    #allocation10 [shape = 'u8[512]{0}', space=vmem, size = 0x400, scoped, tag = 'input window, operand 4, single buffered']
    #allocation11 [shape = 'u8[8192]{0}', space=vmem, size = 0x2000, scoped, tag = 'input window, operand 5, single buffered']
    #allocation12 [shape = 's32[1]{0}', space=sflag, size = 0x4, scoped, tag = 'scoped memory for tpu_custom_call.1']
    #allocation13 [shape = 'u8[512]{0}', space=vmem, size = 0x400, scoped, tag = 'input window, operand 6, single buffered']
    #allocation14 [shape = 'u8[8192]{0}', space=vmem, size = 0x2000, scoped, tag = 'input window, operand 7, single buffered']
    #allocation15 [shape = 's32[1]{0}', space=sflag, size = 0x4, scoped, tag = 'scoped memory for tpu_custom_call.1']
    #allocation16 [shape = 'u8[512]{0}', space=vmem, size = 0x400, scoped, tag = 'input window, operand 8, single buffered']
    #allocation17 [shape = 'u8[8192]{0}', space=vmem, size = 0x2000, scoped, tag = 'output window, operand 0']
    %16 = vsyncpa [#allocation3], 0
    %s17 = scalar_lea.sflag [#allocation3], 1
    %18 = vsyncpa %s17, 0
    %19 = vsyncpa [#allocation6], 0
    %s20 = scalar_lea.sflag [#allocation6], 1
    %21 = vsyncpa %s20, 0
    %22 = vsyncpa [#allocation9], 0
    %23 = vsyncpa [#allocation12], 0
    %24 = vsyncpa [#allocation15], 0
    %25 = vsyncpa [#allocation4], 0
    %s26 = scalar_lea.sflag [#allocation4], 1
    %27 = vsyncpa %s26, 0
    loop: start=0, step=1, limit=4
    $region2: #{tpu_custom_call.1} parent=1 // loop_pre_header
      _
    $region3: #{tpu_custom_call.1} parent=1 // loop_header
      %s29 = sphi 0, %s33
      %p30 = scmp.ge.s32.totalorder %s29, 4
      %s39 = sphi 0, %s41
      %s42 = sphi 0, %s39
      %s43 = sphi 0, %s42
      %s59 = sphi 0, %s43
      %s65 = sphi 0, %s67
      %s68 = sphi 0, %s65
      %s69 = sphi 0, %s68
      %s85 = sphi 0, %s69
      %s91 = sphi 0, %s93
      %s94 = sphi 0, %s91
      %s95 = sphi 0, %s94
      %s111 = sphi 0, %s95
      %s115 = sphi 0, %s115
      %s117 = sphi 0, %s115
      %s118 = sphi 0, %s117
      %s132 = sphi 0, %s118
      %s136 = sphi 0, %s136
      %s138 = sphi 0, %s136
      %s139 = sphi 0, %s138
      %s153 = sphi 0, %s139
      %s157 = sphi 0, %s157
      %s159 = sphi 0, %s157
      %s160 = sphi 0, %s159
      %s174 = sphi 0, %s160
      %s178 = sphi 0, %s178
      %s180 = sphi 0, %s178
      %s181 = sphi 0, %s180
      %s195 = sphi 0, %s181
      %s199 = sphi 0, %s199
      %s201 = sphi 0, %s199
      %s202 = sphi 0, %s201
      %s216 = sphi 0, %s202
      %s220 = sphi 0, %s220
      %s222 = sphi 0, %s220
      %s223 = sphi 0, %s222
      %s237 = sphi 0, %s223
      %s241 = sphi 0, %s241
      %s243 = sphi 0, %s241
      %s244 = sphi 0, %s243
      %s258 = sphi 0, %s244
      %s262 = sphi 0, %s262
      %s264 = sphi 0, %s262
      %s265 = sphi 0, %s264
      %s279 = sphi 0, %s265
      %s285 = sphi 0, %s287
      %s288 = sphi 0, %s285
      %s289 = sphi 0, %s288
      %s305 = sphi 0, %s289
    $region4: #{tpu_custom_call.1} parent=1 // loop_header_branch
      %32 = sbr.rel (%p30) target = $region8
    $region5: #{tpu_custom_call.1} parent=1 // loop_body
      %s34 = ssub.s32 %s29, 1
      %s35 = ssub.s32 %s29, 2
      %s36 = sadd.s32 %s29, 1
      %s37 = ssub.s32 %s29, %s36
      %p38 = scmp.eq.s32.totalorder %s37, 0
      %s40 = sadd.s32 %s39, 1
      %s41 = scalar_select %p38, %s39, %s40
      %p44 = pneg %p38
      %p45 = scmp.eq.s32.totalorder %s29, 1
      %p46 = por %p44, %p45
      %p47 = scmp.ne.s32.totalorder %s39, %s42
      %p48 = scmp.eq.s32.totalorder %s29, 0
      %p49 = por %p47, %p48
      %p50 = scmp.ne.s32.totalorder %s39, %s42
      %p51 = scmp.eq.s32.totalorder %s34, 1
      %p52 = por %p50, %p51
      %p53 = scmp.ne.s32.totalorder %s42, %s43
      %p54 = scmp.eq.s32.totalorder %s34, 0
      %p55 = por %p53, %p54
      %p56 = scmp.ne.s32.totalorder %s42, %s43
      %p57 = scmp.eq.s32.totalorder %s35, 1
      %p58 = por %p56, %p57
      %p60 = scmp.ne.s32.totalorder %s43, %s59
      %p61 = scmp.eq.s32.totalorder %s35, 0
      %p62 = por %p60, %p61
      %s63 = ssub.s32 %s29, %s36
      %p64 = scmp.eq.s32.totalorder %s63, 0
      %s66 = sadd.s32 %s65, 1
      %s67 = scalar_select %p64, %s65, %s66
      %p70 = pneg %p64
      %p71 = scmp.eq.s32.totalorder %s29, 1
      %p72 = por %p70, %p71
      %p73 = scmp.ne.s32.totalorder %s65, %s68
      %p74 = scmp.eq.s32.totalorder %s29, 0
      %p75 = por %p73, %p74
      %p76 = scmp.ne.s32.totalorder %s65, %s68
      %p77 = scmp.eq.s32.totalorder %s34, 1
      %p78 = por %p76, %p77
      %p79 = scmp.ne.s32.totalorder %s68, %s69
      %p80 = scmp.eq.s32.totalorder %s34, 0
      %p81 = por %p79, %p80
      %p82 = scmp.ne.s32.totalorder %s68, %s69
      %p83 = scmp.eq.s32.totalorder %s35, 1
      %p84 = por %p82, %p83
      %p86 = scmp.ne.s32.totalorder %s69, %s85
      %p87 = scmp.eq.s32.totalorder %s35, 0
      %p88 = por %p86, %p87
      %s89 = ssub.s32 %s29, %s36
      %p90 = scmp.eq.s32.totalorder %s89, 0
      %s92 = sadd.s32 %s91, 1
      %s93 = scalar_select %p90, %s91, %s92
      %p96 = pneg %p90
      %p97 = scmp.eq.s32.totalorder %s29, 1
      %p98 = por %p96, %p97
      %p99 = scmp.ne.s32.totalorder %s91, %s94
      %p100 = scmp.eq.s32.totalorder %s29, 0
      %p101 = por %p99, %p100
      %p102 = scmp.ne.s32.totalorder %s91, %s94
      %p103 = scmp.eq.s32.totalorder %s34, 1
      %p104 = por %p102, %p103
      %p105 = scmp.ne.s32.totalorder %s94, %s95
      %p106 = scmp.eq.s32.totalorder %s34, 0
      %p107 = por %p105, %p106
      %p108 = scmp.ne.s32.totalorder %s94, %s95
      %p109 = scmp.eq.s32.totalorder %s35, 1
      %p110 = por %p108, %p109
      %p112 = scmp.ne.s32.totalorder %s95, %s111
      %p113 = scmp.eq.s32.totalorder %s35, 0
      %p114 = por %p112, %p113
      %s116 = sadd.s32 %s115, 1
      %p119 = scmp.eq.s32.totalorder %s29, 1
      %p120 = scmp.ne.s32.totalorder %s115, %s117
      %p121 = scmp.eq.s32.totalorder %s29, 0
      %p122 = por %p120, %p121
      %p123 = scmp.ne.s32.totalorder %s115, %s117
      %p124 = scmp.eq.s32.totalorder %s34, 1
      %p125 = por %p123, %p124
      %p126 = scmp.ne.s32.totalorder %s117, %s118
      %p127 = scmp.eq.s32.totalorder %s34, 0
      %p128 = por %p126, %p127
      %p129 = scmp.ne.s32.totalorder %s117, %s118
      %p130 = scmp.eq.s32.totalorder %s35, 1
      %p131 = por %p129, %p130
      %p133 = scmp.ne.s32.totalorder %s118, %s132
      %p134 = scmp.eq.s32.totalorder %s35, 0
      %p135 = por %p133, %p134
      %s137 = sadd.s32 %s136, 1
      %p140 = scmp.eq.s32.totalorder %s29, 1
      %p141 = scmp.ne.s32.totalorder %s136, %s138
      %p142 = scmp.eq.s32.totalorder %s29, 0
      %p143 = por %p141, %p142
      %p144 = scmp.ne.s32.totalorder %s136, %s138
      %p145 = scmp.eq.s32.totalorder %s34, 1
      %p146 = por %p144, %p145
      %p147 = scmp.ne.s32.totalorder %s138, %s139
      %p148 = scmp.eq.s32.totalorder %s34, 0
      %p149 = por %p147, %p148
      %p150 = scmp.ne.s32.totalorder %s138, %s139
      %p151 = scmp.eq.s32.totalorder %s35, 1
      %p152 = por %p150, %p151
      %p154 = scmp.ne.s32.totalorder %s139, %s153
      %p155 = scmp.eq.s32.totalorder %s35, 0
      %p156 = por %p154, %p155
      %s158 = sadd.s32 %s157, 1
      %p161 = scmp.eq.s32.totalorder %s29, 1
      %p162 = scmp.ne.s32.totalorder %s157, %s159
      %p163 = scmp.eq.s32.totalorder %s29, 0
      %p164 = por %p162, %p163
      %p165 = scmp.ne.s32.totalorder %s157, %s159
      %p166 = scmp.eq.s32.totalorder %s34, 1
      %p167 = por %p165, %p166
      %p168 = scmp.ne.s32.totalorder %s159, %s160
      %p169 = scmp.eq.s32.totalorder %s34, 0
      %p170 = por %p168, %p169
      %p171 = scmp.ne.s32.totalorder %s159, %s160
      %p172 = scmp.eq.s32.totalorder %s35, 1
      %p173 = por %p171, %p172
      %p175 = scmp.ne.s32.totalorder %s160, %s174
      %p176 = scmp.eq.s32.totalorder %s35, 0
      %p177 = por %p175, %p176
      %s179 = sadd.s32 %s178, 1
      %p182 = scmp.eq.s32.totalorder %s29, 1
      %p183 = scmp.ne.s32.totalorder %s178, %s180
      %p184 = scmp.eq.s32.totalorder %s29, 0
      %p185 = por %p183, %p184
      %p186 = scmp.ne.s32.totalorder %s178, %s180
      %p187 = scmp.eq.s32.totalorder %s34, 1
      %p188 = por %p186, %p187
      %p189 = scmp.ne.s32.totalorder %s180, %s181
      %p190 = scmp.eq.s32.totalorder %s34, 0
      %p191 = por %p189, %p190
      %p192 = scmp.ne.s32.totalorder %s180, %s181
      %p193 = scmp.eq.s32.totalorder %s35, 1
      %p194 = por %p192, %p193
      %p196 = scmp.ne.s32.totalorder %s181, %s195
      %p197 = scmp.eq.s32.totalorder %s35, 0
      %p198 = por %p196, %p197
      %s200 = sadd.s32 %s199, 1
      %p203 = scmp.eq.s32.totalorder %s29, 1
      %p204 = scmp.ne.s32.totalorder %s199, %s201
      %p205 = scmp.eq.s32.totalorder %s29, 0
      %p206 = por %p204, %p205
      %p207 = scmp.ne.s32.totalorder %s199, %s201
      %p208 = scmp.eq.s32.totalorder %s34, 1
      %p209 = por %p207, %p208
      %p210 = scmp.ne.s32.totalorder %s201, %s202
      %p211 = scmp.eq.s32.totalorder %s34, 0
      %p212 = por %p210, %p211
      %p213 = scmp.ne.s32.totalorder %s201, %s202
      %p214 = scmp.eq.s32.totalorder %s35, 1
      %p215 = por %p213, %p214
      %p217 = scmp.ne.s32.totalorder %s202, %s216
      %p218 = scmp.eq.s32.totalorder %s35, 0
      %p219 = por %p217, %p218
      %s221 = sadd.s32 %s220, 1
      %p224 = scmp.eq.s32.totalorder %s29, 1
      %p225 = scmp.ne.s32.totalorder %s220, %s222
      %p226 = scmp.eq.s32.totalorder %s29, 0
      %p227 = por %p225, %p226
      %p228 = scmp.ne.s32.totalorder %s220, %s222
      %p229 = scmp.eq.s32.totalorder %s34, 1
      %p230 = por %p228, %p229
      %p231 = scmp.ne.s32.totalorder %s222, %s223
      %p232 = scmp.eq.s32.totalorder %s34, 0
      %p233 = por %p231, %p232
      %p234 = scmp.ne.s32.totalorder %s222, %s223
      %p235 = scmp.eq.s32.totalorder %s35, 1
      %p236 = por %p234, %p235
      %p238 = scmp.ne.s32.totalorder %s223, %s237
      %p239 = scmp.eq.s32.totalorder %s35, 0
      %p240 = por %p238, %p239
      %s242 = sadd.s32 %s241, 1
      %p245 = scmp.eq.s32.totalorder %s29, 1
      %p246 = scmp.ne.s32.totalorder %s241, %s243
      %p247 = scmp.eq.s32.totalorder %s29, 0
      %p248 = por %p246, %p247
      %p249 = scmp.ne.s32.totalorder %s241, %s243
      %p250 = scmp.eq.s32.totalorder %s34, 1
      %p251 = por %p249, %p250
      %p252 = scmp.ne.s32.totalorder %s243, %s244
      %p253 = scmp.eq.s32.totalorder %s34, 0
      %p254 = por %p252, %p253
      %p255 = scmp.ne.s32.totalorder %s243, %s244
      %p256 = scmp.eq.s32.totalorder %s35, 1
      %p257 = por %p255, %p256
      %p259 = scmp.ne.s32.totalorder %s244, %s258
      %p260 = scmp.eq.s32.totalorder %s35, 0
      %p261 = por %p259, %p260
      %s263 = sadd.s32 %s262, 1
      %p266 = scmp.eq.s32.totalorder %s29, 1
      %p267 = scmp.ne.s32.totalorder %s262, %s264
      %p268 = scmp.eq.s32.totalorder %s29, 0
      %p269 = por %p267, %p268
      %p270 = scmp.ne.s32.totalorder %s262, %s264
      %p271 = scmp.eq.s32.totalorder %s34, 1
      %p272 = por %p270, %p271
      %p273 = scmp.ne.s32.totalorder %s264, %s265
      %p274 = scmp.eq.s32.totalorder %s34, 0
      %p275 = por %p273, %p274
      %p276 = scmp.ne.s32.totalorder %s264, %s265
      %p277 = scmp.eq.s32.totalorder %s35, 1
      %p278 = por %p276, %p277
      %p280 = scmp.ne.s32.totalorder %s265, %s279
      %p281 = scmp.eq.s32.totalorder %s35, 0
      %p282 = por %p280, %p281
      %s283 = ssub.s32 %s29, %s36
      %p284 = scmp.eq.s32.totalorder %s283, 0
      %s286 = sadd.s32 %s285, 1
      %s287 = scalar_select %p284, %s285, %s286
      %p290 = pneg %p284
      %p291 = scmp.eq.s32.totalorder %s29, 1
      %p292 = por %p290, %p291
      %p293 = scmp.ne.s32.totalorder %s285, %s288
      %p294 = scmp.eq.s32.totalorder %s29, 0
      %p295 = por %p293, %p294
      %p296 = scmp.ne.s32.totalorder %s285, %s288
      %p297 = scmp.eq.s32.totalorder %s34, 1
      %p298 = por %p296, %p297
      %p299 = scmp.ne.s32.totalorder %s288, %s289
      %p300 = scmp.eq.s32.totalorder %s34, 0
      %p301 = por %p299, %p300
      %p302 = scmp.ne.s32.totalorder %s288, %s289
      %p303 = scmp.eq.s32.totalorder %s35, 1
      %p304 = por %p302, %p303
      %p306 = scmp.ne.s32.totalorder %s289, %s305
      %p307 = scmp.eq.s32.totalorder %s35, 0
      %p308 = por %p306, %p307
      %p309 = scmp.le.s32.totalorder 1, %s29
      %p310 = scmp.lt.s32.totalorder %s29, 3
      %p311 = pnand %p309, %p310
      %p312 = pneg %p311
      // Predicated region
      $region9: #{tpu_custom_call.1} parent=5 // pred_check
        _
      $region10: #{tpu_custom_call.1} parent=5 // pred_check_branch
        %314 = sbr.rel (%p311) target = $region12
      $region11: #{tpu_custom_call.1} parent=5 // pred_region
        %s315 = ssub.s32 %s29, 1
        // Predicated region
        $region13: #{tpu_custom_call.1} parent=11 // pred_check
          %p316 = pneg %p128
        $region14: #{tpu_custom_call.1} parent=11 // pred_check_branch
          %318 = sbr.rel (%p316) target = $region16
        $region15: #{tpu_custom_call.1} parent=11 // pred_region
          %s320 = ssub.s32 256, 256
          %321 = vsyncadd [#allocation9], %s320
          %s322 = sshll.u32 [#allocation8], 4
          %s323 = int_to_ptr.vmem [resolvable:$true] %s322
          %328 = dma.hbm_to_vmem [thread:$0]  %s3, 256, %s323, [#allocation9], 64, 64, 4
        $region16: #{tpu_custom_call.1} parent=11 // pred_fallthru
          _
        // Predicated region
        $region17: #{tpu_custom_call.1} parent=11 // pred_check
          %p329 = pneg %p149
        $region18: #{tpu_custom_call.1} parent=11 // pred_check_branch
          %331 = sbr.rel (%p329) target = $region20
        $region19: #{tpu_custom_call.1} parent=11 // pred_region
          %s333 = ssub.s32 16, 16
          %334 = vsyncadd [#allocation9], %s333
          %s336 = sshll.u32 [#allocation10], 4
          %s337 = int_to_ptr.vmem [resolvable:$true] %s336
          %339 = dma.hbm_to_vmem [thread:$0]  %s4, 16, %s337, [#allocation9]
        $region20: #{tpu_custom_call.1} parent=11 // pred_fallthru
          _
        // Predicated region
        $region21: #{tpu_custom_call.1} parent=11 // pred_check
          %p340 = pneg %p170
        $region22: #{tpu_custom_call.1} parent=11 // pred_check_branch
          %342 = sbr.rel (%p340) target = $region24
        $region23: #{tpu_custom_call.1} parent=11 // pred_region
          %s344 = ssub.s32 256, 256
          %345 = vsyncadd [#allocation12], %s344
          %s346 = sshll.u32 [#allocation11], 4
          %s347 = int_to_ptr.vmem [resolvable:$true] %s346
          %352 = dma.hbm_to_vmem [thread:$0]  %s5, 256, %s347, [#allocation12], 64, 64, 4
        $region24: #{tpu_custom_call.1} parent=11 // pred_fallthru
          _
        // Predicated region
        $region25: #{tpu_custom_call.1} parent=11 // pred_check
          %p353 = pneg %p191
        $region26: #{tpu_custom_call.1} parent=11 // pred_check_branch
          %355 = sbr.rel (%p353) target = $region28
        $region27: #{tpu_custom_call.1} parent=11 // pred_region
          %s357 = ssub.s32 16, 16
          %358 = vsyncadd [#allocation12], %s357
          %s360 = sshll.u32 [#allocation13], 4
          %s361 = int_to_ptr.vmem [resolvable:$true] %s360
          %363 = dma.hbm_to_vmem [thread:$0]  %s6, 16, %s361, [#allocation12]
        $region28: #{tpu_custom_call.1} parent=11 // pred_fallthru
          _
        // Predicated region
        $region29: #{tpu_custom_call.1} parent=11 // pred_check
          %p364 = pneg %p212
        $region30: #{tpu_custom_call.1} parent=11 // pred_check_branch
          %366 = sbr.rel (%p364) target = $region32
        $region31: #{tpu_custom_call.1} parent=11 // pred_region
          %s368 = ssub.s32 256, 256
          %369 = vsyncadd [#allocation15], %s368
          %s370 = sshll.u32 [#allocation14], 4
          %s371 = int_to_ptr.vmem [resolvable:$true] %s370
          %376 = dma.hbm_to_vmem [thread:$0]  %s7, 256, %s371, [#allocation15], 64, 64, 4
        $region32: #{tpu_custom_call.1} parent=11 // pred_fallthru
          _
        // Predicated region
        $region33: #{tpu_custom_call.1} parent=11 // pred_check
          %p377 = pneg %p233
        $region34: #{tpu_custom_call.1} parent=11 // pred_check_branch
          %379 = sbr.rel (%p377) target = $region36
        $region35: #{tpu_custom_call.1} parent=11 // pred_region
          %s381 = ssub.s32 16, 16
          %382 = vsyncadd [#allocation15], %s381
          %s384 = sshll.u32 [#allocation16], 4
          %s385 = int_to_ptr.vmem [resolvable:$true] %s384
          %387 = dma.hbm_to_vmem [thread:$0]  %s8, 16, %s385, [#allocation15]
        $region36: #{tpu_custom_call.1} parent=11 // pred_fallthru
          _
        // Predicated region
        $region37: #{tpu_custom_call.1} parent=11 // pred_check
          %p388 = pneg %p254
        $region38: #{tpu_custom_call.1} parent=11 // pred_check_branch
          %390 = sbr.rel (%p388) target = $region40
        $region39: #{tpu_custom_call.1} parent=11 // pred_region
          _
        $region40: #{tpu_custom_call.1} parent=11 // pred_fallthru
          _
        // Predicated region
        $region41: #{tpu_custom_call.1} parent=11 // pred_check
          %p391 = pneg %p275
        $region42: #{tpu_custom_call.1} parent=11 // pred_check_branch
          %393 = sbr.rel (%p391) target = $region44
        $region43: #{tpu_custom_call.1} parent=11 // pred_region
          _
        $region44: #{tpu_custom_call.1} parent=11 // pred_fallthru
          _
      $region12: #{tpu_custom_call.1} parent=5 // pred_fallthru
        _
      %p394 = scmp.lt.s32.totalorder %s29, 2
      // Predicated region
      $region45: #{tpu_custom_call.1} parent=5 // pred_check
        %p395 = pneg %p394
      $region46: #{tpu_custom_call.1} parent=5 // pred_check_branch
        %397 = sbr.rel (%p395) target = $region48
      $region47: #{tpu_custom_call.1} parent=5 // pred_region
        // Predicated region
        $region49: #{tpu_custom_call.1} parent=47 // pred_check
          %p398 = pneg %p49
        $region50: #{tpu_custom_call.1} parent=47 // pred_check_branch
          %400 = sbr.rel (%p398) target = $region52
        $region51: #{tpu_custom_call.1} parent=47 // pred_region
          %s401 = sand.u32 %s39, 1
          %s402 = scalar_lea.sflag [#allocation3], %s401
          %s403 = sand.u32 %s39, 1
          %s404 = smul.addr %s403, 8
          %s405 = scalar_lea.vmem [#allocation2], %s404
          %s407 = ssub.s32 128, 128
          %408 = vsyncadd %s402, %s407
          %s409 = smul.addr %s29, 128
          %s410 = scalar_lea.hbm %s0, %s409
          %s412 = sshll.u32 %s405, 4
          %s413 = int_to_ptr.vmem [resolvable:$true] %s412
          %415 = dma.hbm_to_vmem [thread:$0]  %s410, 128, %s413, %s402
        $region52: #{tpu_custom_call.1} parent=47 // pred_fallthru
          _
        // Predicated region
        $region53: #{tpu_custom_call.1} parent=47 // pred_check
          %p416 = pneg %p75
        $region54: #{tpu_custom_call.1} parent=47 // pred_check_branch
          %418 = sbr.rel (%p416) target = $region56
        $region55: #{tpu_custom_call.1} parent=47 // pred_region
          %s419 = sand.u32 %s29, 1
          %s420 = scalar_lea.sflag [#allocation6], %s419
          %s421 = sand.u32 %s65, 1
          %s422 = smul.addr %s421, 8
          %s423 = scalar_lea.vmem [#allocation5], %s422
          %s425 = ssub.s32 128, 128
          %426 = vsyncadd %s420, %s425
          %s427 = smul.addr %s29, 128
          %s428 = scalar_lea.hbm %s1, %s427
          %s430 = sshll.u32 %s423, 4
          %s431 = int_to_ptr.vmem [resolvable:$true] %s430
          %433 = dma.hbm_to_vmem [thread:$0]  %s428, 128, %s431, %s420
        $region56: #{tpu_custom_call.1} parent=47 // pred_fallthru
          _
        // Predicated region
        $region57: #{tpu_custom_call.1} parent=47 // pred_check
          %p434 = pneg %p101
        $region58: #{tpu_custom_call.1} parent=47 // pred_check_branch
          %436 = sbr.rel (%p434) target = $region60
        $region59: #{tpu_custom_call.1} parent=47 // pred_region
          %s437 = sand.u32 %s29, 1
          %s438 = scalar_lea.sflag [#allocation6], %s437
          %s439 = sand.u32 %s91, 1
          %s440 = smul.addr %s439, 8
          %s441 = scalar_lea.vmem [#allocation7], %s440
          %s443 = ssub.s32 128, 128
          %444 = vsyncadd %s438, %s443
          %s445 = smul.addr %s29, 128
          %s446 = scalar_lea.hbm %s2, %s445
          %s448 = sshll.u32 %s441, 4
          %s449 = int_to_ptr.vmem [resolvable:$true] %s448
          %451 = dma.hbm_to_vmem [thread:$0]  %s446, 128, %s449, %s438
        $region60: #{tpu_custom_call.1} parent=47 // pred_fallthru
          _
      $region48: #{tpu_custom_call.1} parent=5 // pred_fallthru
        _
      %p452 = scmp.le.s32.totalorder 1, %s29
      %p453 = scmp.lt.s32.totalorder %s29, 3
      %p454 = pnand %p452, %p453
      %p455 = pneg %p454
      // Predicated region
      $region61: #{tpu_custom_call.1} parent=5 // pred_check
        _
      $region62: #{tpu_custom_call.1} parent=5 // pred_check_branch
        %457 = sbr.rel (%p454) target = $region64
      $region63: #{tpu_custom_call.1} parent=5 // pred_region
        %s458 = ssub.s32 %s29, 1
        %s459 = sand.u32 %s42, 1
        %s460 = scalar_lea.sflag [#allocation3], %s459
        %s461 = sand.u32 %s42, 1
        %s462 = smul.addr %s461, 8
        %s463 = scalar_lea.vmem [#allocation2], %s462
        // Predicated region
        $region65: #{tpu_custom_call.1} parent=63 // pred_check
          %p464 = pneg %p55
        $region66: #{tpu_custom_call.1} parent=63 // pred_check_branch
          %466 = sbr.rel (%p464) target = $region68
        $region67: #{tpu_custom_call.1} parent=63 // pred_region
          %467 = dma.done %s460, 128
        $region68: #{tpu_custom_call.1} parent=63 // pred_fallthru
          _
        %s468 = sand.u32 %s34, 1
        %s469 = scalar_lea.sflag [#allocation6], %s468
        %s470 = sand.u32 %s68, 1
        %s471 = smul.addr %s470, 8
        %s472 = scalar_lea.vmem [#allocation5], %s471
        // Predicated region
        $region69: #{tpu_custom_call.1} parent=63 // pred_check
          %p473 = pneg %p81
        $region70: #{tpu_custom_call.1} parent=63 // pred_check_branch
          %475 = sbr.rel (%p473) target = $region72
        $region71: #{tpu_custom_call.1} parent=63 // pred_region
          %476 = dma.done %s469, 128
        $region72: #{tpu_custom_call.1} parent=63 // pred_fallthru
          _
        %s477 = sand.u32 %s34, 1
        %s478 = scalar_lea.sflag [#allocation6], %s477
        %s479 = sand.u32 %s94, 1
        %s480 = smul.addr %s479, 8
        %s481 = scalar_lea.vmem [#allocation7], %s480
        // Predicated region
        $region73: #{tpu_custom_call.1} parent=63 // pred_check
          %p482 = pneg %p107
        $region74: #{tpu_custom_call.1} parent=63 // pred_check_branch
          %484 = sbr.rel (%p482) target = $region76
        $region75: #{tpu_custom_call.1} parent=63 // pred_region
          %485 = dma.done %s478, 128
        $region76: #{tpu_custom_call.1} parent=63 // pred_fallthru
          _
        // Predicated region
        $region77: #{tpu_custom_call.1} parent=63 // pred_check
          %p486 = pneg %p128
        $region78: #{tpu_custom_call.1} parent=63 // pred_check_branch
          %488 = sbr.rel (%p486) target = $region80
        $region79: #{tpu_custom_call.1} parent=63 // pred_region
          %489 = dma.done [#allocation9], 256
        $region80: #{tpu_custom_call.1} parent=63 // pred_fallthru
          _
        // Predicated region
        $region81: #{tpu_custom_call.1} parent=63 // pred_check
          %p490 = pneg %p149
        $region82: #{tpu_custom_call.1} parent=63 // pred_check_branch
          %492 = sbr.rel (%p490) target = $region84
        $region83: #{tpu_custom_call.1} parent=63 // pred_region
          %493 = dma.done [#allocation9], 16
        $region84: #{tpu_custom_call.1} parent=63 // pred_fallthru
          _
        // Predicated region
        $region85: #{tpu_custom_call.1} parent=63 // pred_check
          %p494 = pneg %p170
        $region86: #{tpu_custom_call.1} parent=63 // pred_check_branch
          %496 = sbr.rel (%p494) target = $region88
        $region87: #{tpu_custom_call.1} parent=63 // pred_region
          %497 = dma.done [#allocation12], 256
        $region88: #{tpu_custom_call.1} parent=63 // pred_fallthru
          _
        // Predicated region
        $region89: #{tpu_custom_call.1} parent=63 // pred_check
          %p498 = pneg %p191
        $region90: #{tpu_custom_call.1} parent=63 // pred_check_branch
          %500 = sbr.rel (%p498) target = $region92
        $region91: #{tpu_custom_call.1} parent=63 // pred_region
          %501 = dma.done [#allocation12], 16
        $region92: #{tpu_custom_call.1} parent=63 // pred_fallthru
          _
        // Predicated region
        $region93: #{tpu_custom_call.1} parent=63 // pred_check
          %p502 = pneg %p212
        $region94: #{tpu_custom_call.1} parent=63 // pred_check_branch
          %504 = sbr.rel (%p502) target = $region96
        $region95: #{tpu_custom_call.1} parent=63 // pred_region
          %505 = dma.done [#allocation15], 256
        $region96: #{tpu_custom_call.1} parent=63 // pred_fallthru
          _
        // Predicated region
        $region97: #{tpu_custom_call.1} parent=63 // pred_check
          %p506 = pneg %p233
        $region98: #{tpu_custom_call.1} parent=63 // pred_check_branch
          %508 = sbr.rel (%p506) target = $region100
        $region99: #{tpu_custom_call.1} parent=63 // pred_region
          %509 = dma.done [#allocation15], 16
        $region100: #{tpu_custom_call.1} parent=63 // pred_fallthru
          _
        %s510 = sand.u32 %s42, 1
        %s511 = scalar_lea.sflag [#allocation3], %s510
        %s512 = sand.u32 %s42, 1
        %s513 = smul.addr %s512, 8
        %s514 = scalar_lea.vmem [#allocation2], %s513
        %p515 = pneg %p55
        %p516 = pneg %p52
        %s517 = sand.u32 %s34, 1
        %s518 = scalar_lea.sflag [#allocation6], %s517
        %s519 = sand.u32 %s68, 1
        %s520 = smul.addr %s519, 8
        %s521 = scalar_lea.vmem [#allocation5], %s520
        %p522 = pneg %p81
        %p523 = pneg %p78
        %s524 = sand.u32 %s34, 1
        %s525 = scalar_lea.sflag [#allocation6], %s524
        %s526 = sand.u32 %s94, 1
        %s527 = smul.addr %s526, 8
        %s528 = scalar_lea.vmem [#allocation7], %s527
        %p529 = pneg %p107
        %p530 = pneg %p104
        %p531 = pneg %p128
        %p532 = pneg %p125
        %p533 = pneg %p149
        %p534 = pneg %p146
        %p535 = pneg %p170
        %p536 = pneg %p167
        %p537 = pneg %p191
        %p538 = pneg %p188
        %p539 = pneg %p212
        %p540 = pneg %p209
        %p541 = pneg %p233
        %p542 = pneg %p230
        %p543 = pneg %p254
        %p544 = pneg %p251
        %p545 = pneg %p275
        %p546 = pneg %p272
        %p547 = pneg %p301
        %p548 = pneg %p298
        %s549 = sand.u32 %s288, 1
        %s550 = scalar_lea.sflag [#allocation4], %s549
        %s551 = sand.u32 %s288, 1
        %s552 = smul.addr %s551, 8
        %s553 = scalar_lea.vmem [#allocation17], %s552
        %v555 = vld [vmem:[%s463] sm:$0xff]
        %v556 = vpack.c.bf16 %v555, %v555
        %v557 = vld [vmem:[%s472] sm:$0xff]
        %v558 = vpack.c.bf16 %v557, %v557
        %v559 = vld [vmem:[%s481] sm:$0xff]
        %v560 = vpack.c.bf16 %v559, %v559
        %v561 = vld [vmem:[#allocation8] sm:$0xf]
        %v562 = vld [vmem:[#allocation8 + $0x4] sm:$0xf]
        %v563 = vld [vmem:[#allocation8 + $0x8] sm:$0xf]
        %v564 = vld [vmem:[#allocation8 + $0xc] sm:$0xf]
        %v565 = vld [vmem:[#allocation10] sm:$0x1]
        %v567 = vlaneseq
        %v568 = vshrl.u32 %v567, 7
        %v569 = vsub.s32 0, %v568
        %v570 = vrot.slane %v565, %v569
        %v576 = vunpack.c.l.b16 %v561
        %v577 = vunpack.c.l.b16 %v562
        %v578 = vunpack.c.l.b16 %v563
        %v579 = vunpack.c.l.b16 %v564
        %v580 = vpack.c.b16 %v577, %v576
        %v581 = vpack.c.b16 %v579, %v578
        %vm584 = vcmask 261120
        %v586 = vsel %vm584, %v556, 0
        %588 = vmatprep.subr.bf16.mxu0 0
        %589 = vmatpush1.bf16.msra.mxu0 0
        %590 = vmatprep.subr.bf16.mxu0 0
        %591 = vmatpush1.bf16.msra.mxu0 0
        %592 = vmatprep.subr.bf16.mxu0 0
        %593 = vmatpush1.bf16.msra.mxu0 0
        %594 = vmatprep.subr.bf16.mxu0 0
        %595 = vmatpush1.bf16.msra.mxu0 0
        %596 = vmatprep.subr.bf16.mxu0 0
        %597 = vmatpush1.bf16.msra.mxu0 0
        %598 = vmatprep.subr.bf16.mxu0 0
        %599 = vmatpush1.bf16.msra.mxu0 0
        %600 = vmatprep.subr.bf16.mxu0 0
        %601 = vmatpush1.bf16.msra.mxu0 %v581
        %602 = vmatprep.subr.bf16.mxu0 0
        %603 = vmatpush1.bf16.msra.mxu0 %v580
        %604 = vmatprep.subr.bf16.mxu0 0
        %605 = vmatpush2.bf16.msra.mxu0 0
        %606 = vmatprep.subr.bf16.mxu0 0
        %607 = vmatpush2.bf16.msra.mxu0 0
        %608 = vmatprep.subr.bf16.mxu0 0
        %609 = vmatpush2.bf16.msra.mxu0 0
        %610 = vmatprep.subr.bf16.mxu0 0
        %611 = vmatpush2.bf16.msra.mxu0 0
        %612 = vmatprep.subr.bf16.mxu0 0
        %613 = vmatpush2.bf16.msra.mxu0 0
        %614 = vmatprep.subr.bf16.mxu0 0
        %615 = vmatpush2.bf16.msra.mxu0 0
        %616 = vmatprep.subr.bf16.mxu0 0
        %617 = vmatpush2.bf16.msra.mxu0 0
        %618 = vmatprep.subr.bf16.mxu0 0
        %619 = vmatpush2.bf16.msra.mxu0 0
        %620 = vmatprep.mubr.bf16.mxu0 0
        %621 = vmatmul.mubr.bf16.gmra.mxu0 %v586
        %v622 = vpop.f32.mrf.mxu0
        %v623 = vadd.f32 %v570, %v622
        %v624 = vpop.f32.mrf.mxu0
        %v625 = vpop.f32.mrf.mxu0
        %v626 = vpop.f32.mrf.mxu0
        %627 = vdwg.mxu0
        %v628 = vld [vmem:[#allocation11] sm:$0xf]
        %v629 = vld [vmem:[#allocation11 + $0x4] sm:$0xf]
        %v630 = vld [vmem:[#allocation11 + $0x8] sm:$0xf]
        %v631 = vld [vmem:[#allocation11 + $0xc] sm:$0xf]
        %v632 = vld [vmem:[#allocation13] sm:$0x1]
        %v634 = vlaneseq
        %v635 = vshrl.u32 %v634, 7
        %v636 = vsub.s32 0, %v635
        %v637 = vrot.slane %v632, %v636
        %v643 = vunpack.c.l.b16 %v628
        %v644 = vunpack.c.l.b16 %v629
        %v645 = vunpack.c.l.b16 %v630
        %v646 = vunpack.c.l.b16 %v631
        %v647 = vpack.c.b16 %v644, %v643
        %v648 = vpack.c.b16 %v646, %v645
        %v652 = vsel %vm584, %v558, 0
        %654 = vmatprep.subr.bf16.mxu0 0
        %655 = vmatpush1.bf16.msra.mxu0 0
        %656 = vmatprep.subr.bf16.mxu0 0
        %657 = vmatpush1.bf16.msra.mxu0 0
        %658 = vmatprep.subr.bf16.mxu0 0
        %659 = vmatpush1.bf16.msra.mxu0 0
        %660 = vmatprep.subr.bf16.mxu0 0
        %661 = vmatpush1.bf16.msra.mxu0 0
        %662 = vmatprep.subr.bf16.mxu0 0
        %663 = vmatpush1.bf16.msra.mxu0 0
        %664 = vmatprep.subr.bf16.mxu0 0
        %665 = vmatpush1.bf16.msra.mxu0 0
        %666 = vmatprep.subr.bf16.mxu0 0
        %667 = vmatpush1.bf16.msra.mxu0 %v648
        %668 = vmatprep.subr.bf16.mxu0 0
        %669 = vmatpush1.bf16.msra.mxu0 %v647
        %670 = vmatprep.subr.bf16.mxu0 0
        %671 = vmatpush2.bf16.msra.mxu0 0
        %672 = vmatprep.subr.bf16.mxu0 0
        %673 = vmatpush2.bf16.msra.mxu0 0
        %674 = vmatprep.subr.bf16.mxu0 0
        %675 = vmatpush2.bf16.msra.mxu0 0
        %676 = vmatprep.subr.bf16.mxu0 0
        %677 = vmatpush2.bf16.msra.mxu0 0
        %678 = vmatprep.subr.bf16.mxu0 0
        %679 = vmatpush2.bf16.msra.mxu0 0
        %680 = vmatprep.subr.bf16.mxu0 0
        %681 = vmatpush2.bf16.msra.mxu0 0
        %682 = vmatprep.subr.bf16.mxu0 0
        %683 = vmatpush2.bf16.msra.mxu0 0
        %684 = vmatprep.subr.bf16.mxu0 0
        %685 = vmatpush2.bf16.msra.mxu0 0
        %686 = vmatprep.mubr.bf16.mxu0 0
        %687 = vmatmul.mubr.bf16.gmra.mxu0 %v652
        %v688 = vpop.f32.mrf.mxu0
        %v689 = vadd.f32 %v637, %v688
        %v690 = vpop.f32.mrf.mxu0
        %v691 = vpop.f32.mrf.mxu0
        %v692 = vpop.f32.mrf.mxu0
        %693 = vdwg.mxu0
        %v694 = vld [vmem:[#allocation14] sm:$0xf]
        %v695 = vld [vmem:[#allocation14 + $0x4] sm:$0xf]
        %v696 = vld [vmem:[#allocation14 + $0x8] sm:$0xf]
        %v697 = vld [vmem:[#allocation14 + $0xc] sm:$0xf]
        %v698 = vld [vmem:[#allocation16] sm:$0x1]
        %v700 = vlaneseq
        %v701 = vshrl.u32 %v700, 7
        %v702 = vsub.s32 0, %v701
        %v703 = vrot.slane %v698, %v702
        %v709 = vunpack.c.l.b16 %v694
        %v710 = vunpack.c.l.b16 %v695
        %v711 = vunpack.c.l.b16 %v696
        %v712 = vunpack.c.l.b16 %v697
        %v713 = vpack.c.b16 %v710, %v709
        %v714 = vpack.c.b16 %v712, %v711
        %v718 = vsel %vm584, %v560, 0
        %720 = vmatprep.subr.bf16.mxu0 0
        %721 = vmatpush1.bf16.msra.mxu0 0
        %722 = vmatprep.subr.bf16.mxu0 0
        %723 = vmatpush1.bf16.msra.mxu0 0
        %724 = vmatprep.subr.bf16.mxu0 0
        %725 = vmatpush1.bf16.msra.mxu0 0
        %726 = vmatprep.subr.bf16.mxu0 0
        %727 = vmatpush1.bf16.msra.mxu0 0
        %728 = vmatprep.subr.bf16.mxu0 0
        %729 = vmatpush1.bf16.msra.mxu0 0
        %730 = vmatprep.subr.bf16.mxu0 0
        %731 = vmatpush1.bf16.msra.mxu0 0
        %732 = vmatprep.subr.bf16.mxu0 0
        %733 = vmatpush1.bf16.msra.mxu0 %v714
        %734 = vmatprep.subr.bf16.mxu0 0
        %735 = vmatpush1.bf16.msra.mxu0 %v713
        %736 = vmatprep.subr.bf16.mxu0 0
        %737 = vmatpush2.bf16.msra.mxu0 0
        %738 = vmatprep.subr.bf16.mxu0 0
        %739 = vmatpush2.bf16.msra.mxu0 0
        %740 = vmatprep.subr.bf16.mxu0 0
        %741 = vmatpush2.bf16.msra.mxu0 0
        %742 = vmatprep.subr.bf16.mxu0 0
        %743 = vmatpush2.bf16.msra.mxu0 0
        %744 = vmatprep.subr.bf16.mxu0 0
        %745 = vmatpush2.bf16.msra.mxu0 0
        %746 = vmatprep.subr.bf16.mxu0 0
        %747 = vmatpush2.bf16.msra.mxu0 0
        %748 = vmatprep.subr.bf16.mxu0 0
        %749 = vmatpush2.bf16.msra.mxu0 0
        %750 = vmatprep.subr.bf16.mxu0 0
        %751 = vmatpush2.bf16.msra.mxu0 0
        %752 = vmatprep.mubr.bf16.mxu0 0
        %753 = vmatmul.mubr.bf16.gmra.mxu0 %v718
        %v754 = vpop.f32.mrf.mxu0
        %v755 = vadd.f32 %v703, %v754
        %v756 = vpop.f32.mrf.mxu0
        %v757 = vpop.f32.mrf.mxu0
        %v758 = vpop.f32.mrf.mxu0
        %759 = vdwg.mxu0
        %v760 = vpack.c.bf16 %v623, %v623
        %762 = vrot.lane.b32.xlu0 %v760, 120
        %v763 = vpop.permute.xlu0 %762
        %764 = vrot.lane.b32.xlu0 %v760, 112
        %v765 = vpop.permute.xlu0 %764
        %766 = vrot.lane.b32.xlu0 %v760, 104
        %v767 = vpop.permute.xlu0 %766
        %v769 = vunpack.c.l.s4 1983009808
        %v770 = vunpack.c.0.s8 %v769
        %v771 = vlaneseq
        %v772 = vshrl.u32 %v771, 7
        %v773 = vsub.s32 %v770, %v772
        %v774 = vrot.slane %v760, %v773
        %v777 = vunpack.c.l.s4 1983009808
        %v778 = vunpack.c.0.s8 %v777
        %v779 = vlaneseq
        %v780 = vshrl.u32 %v779, 7
        %v781 = vsub.s32 %v778, %v780
        %v782 = vrot.slane %v765, %v781
        %v783 = vcombine.low %v774, %v782
        %v784 = vcombine.high %v774, %v782
        %v786 = vunpack.c.l.s4 1934713408
        %v787 = vunpack.c.0.s8 %v786
        %v788 = vlaneseq
        %v789 = vshrl.u32 %v788, 7
        %v790 = vsub.s32 %v787, %v789
        %v791 = vrot.slane %v783, %v790
        %v793 = vunpack.c.l.s4 1934713408
        %v794 = vunpack.c.0.s8 %v793
        %v795 = vlaneseq
        %v796 = vshrl.u32 %v795, 7
        %v797 = vsub.s32 %v794, %v796
        %v798 = vrot.slane %v784, %v797
        %v799 = vcombine.high %v791, 0
        %v800 = vcombine.high %v798, 0
        %v803 = vunpack.c.l.s4 1983009808
        %v804 = vunpack.c.0.s8 %v803
        %v805 = vlaneseq
        %v806 = vshrl.u32 %v805, 7
        %v807 = vsub.s32 %v804, %v806
        %v808 = vrot.slane %v763, %v807
        %v811 = vunpack.c.l.s4 1983009808
        %v812 = vunpack.c.0.s8 %v811
        %v813 = vlaneseq
        %v814 = vshrl.u32 %v813, 7
        %v815 = vsub.s32 %v812, %v814
        %v816 = vrot.slane %v767, %v815
        %v817 = vcombine.low %v808, %v816
        %v818 = vcombine.high %v808, %v816
        %v820 = vunpack.c.l.s4 1934713408
        %v821 = vunpack.c.0.s8 %v820
        %v822 = vlaneseq
        %v823 = vshrl.u32 %v822, 7
        %v824 = vsub.s32 %v821, %v823
        %v825 = vrot.slane %v817, %v824
        %v827 = vunpack.c.l.s4 1934713408
        %v828 = vunpack.c.0.s8 %v827
        %v829 = vlaneseq
        %v830 = vshrl.u32 %v829, 7
        %v831 = vsub.s32 %v828, %v830
        %v832 = vrot.slane %v818, %v831
        %v833 = vcombine.high %v825, 0
        %v834 = vcombine.high %v832, 0
        %v837 = vpack.i.b16 %v825, %v791
        %v839 = vshrl.u32 %v791, 16
        %v840 = vshrl.u32 %v825, 16
        %v841 = vpack.i.b16 %v840, %v839
        %v845 = vpack.i.b16 %v833, %v799
        %v847 = vshrl.u32 %v799, 16
        %v848 = vshrl.u32 %v833, 16
        %v849 = vpack.i.b16 %v848, %v847
        %v853 = vpack.i.b16 %v832, %v798
        %v855 = vshrl.u32 %v798, 16
        %v856 = vshrl.u32 %v832, 16
        %v857 = vpack.i.b16 %v856, %v855
        %v861 = vpack.i.b16 %v834, %v800
        %v863 = vshrl.u32 %v800, 16
        %v864 = vshrl.u32 %v834, 16
        %v865 = vpack.i.b16 %v864, %v863
        %v867 = vcombine.low %v837, %v853
        %v869 = vunpack.c.l.s4 1983009808
        %v870 = vunpack.c.0.s8 %v869
        %v871 = vlaneseq
        %v872 = vshrl.u32 %v871, 7
        %v873 = vsub.s32 %v870, %v872
        %v874 = vrot.slane %v867, %v873
        %v875 = vcombine.low %v845, %v861
        %v877 = vunpack.c.l.s4 1983009808
        %v878 = vunpack.c.0.s8 %v877
        %v879 = vlaneseq
        %v880 = vshrl.u32 %v879, 7
        %v881 = vsub.s32 %v878, %v880
        %v882 = vrot.slane %v875, %v881
        %v883 = vcombine.low %v874, %v882
        %v885 = vunpack.c.l.s4 1934713408
        %v886 = vunpack.c.0.s8 %v885
        %v887 = vlaneseq
        %v888 = vshrl.u32 %v887, 7
        %v889 = vsub.s32 %v886, %v888
        %v890 = vrot.slane %v883, %v889
        %v891 = vcombine.high %v890, 0
        %v892 = vcombine.low %v841, %v857
        %v894 = vunpack.c.l.s4 1983009808
        %v895 = vunpack.c.0.s8 %v894
        %v896 = vlaneseq
        %v897 = vshrl.u32 %v896, 7
        %v898 = vsub.s32 %v895, %v897
        %v899 = vrot.slane %v892, %v898
        %v900 = vcombine.low %v849, %v865
        %v902 = vunpack.c.l.s4 1983009808
        %v903 = vunpack.c.0.s8 %v902
        %v904 = vlaneseq
        %v905 = vshrl.u32 %v904, 7
        %v906 = vsub.s32 %v903, %v905
        %v907 = vrot.slane %v900, %v906
        %v908 = vcombine.low %v899, %v907
        %v910 = vunpack.c.l.s4 1934713408
        %v911 = vunpack.c.0.s8 %v910
        %v912 = vlaneseq
        %v913 = vshrl.u32 %v912, 7
        %v914 = vsub.s32 %v911, %v913
        %v915 = vrot.slane %v908, %v914
        %v916 = vcombine.high %v915, 0
        %v919 = vpack.i.b16 %v915, %v890
        %v920 = vshrl.u32 %v890, 16
        %v921 = vshrl.u32 %v915, 16
        %v922 = vpack.i.b16 %v921, %v920
        %v925 = vpack.i.b16 %v916, %v891
        %v926 = vshrl.u32 %v891, 16
        %v927 = vshrl.u32 %v916, 16
        %v928 = vpack.i.b16 %v927, %v926
        %v929 = vpack.c.bf16 %v689, %v689
        %931 = vrot.lane.b32.xlu0 %v929, 120
        %v932 = vpop.permute.xlu0 %931
        %933 = vrot.lane.b32.xlu0 %v929, 112
        %v934 = vpop.permute.xlu0 %933
        %935 = vrot.lane.b32.xlu0 %v929, 104
        %v936 = vpop.permute.xlu0 %935
        %v938 = vunpack.c.l.s4 1983009808
        %v939 = vunpack.c.0.s8 %v938
        %v940 = vlaneseq
        %v941 = vshrl.u32 %v940, 7
        %v942 = vsub.s32 %v939, %v941
        %v943 = vrot.slane %v929, %v942
        %v946 = vunpack.c.l.s4 1983009808
        %v947 = vunpack.c.0.s8 %v946
        %v948 = vlaneseq
        %v949 = vshrl.u32 %v948, 7
        %v950 = vsub.s32 %v947, %v949
        %v951 = vrot.slane %v934, %v950
        %v952 = vcombine.low %v943, %v951
        %v953 = vcombine.high %v943, %v951
        %v955 = vunpack.c.l.s4 1934713408
        %v956 = vunpack.c.0.s8 %v955
        %v957 = vlaneseq
        %v958 = vshrl.u32 %v957, 7
        %v959 = vsub.s32 %v956, %v958
        %v960 = vrot.slane %v952, %v959
        %v962 = vunpack.c.l.s4 1934713408
        %v963 = vunpack.c.0.s8 %v962
        %v964 = vlaneseq
        %v965 = vshrl.u32 %v964, 7
        %v966 = vsub.s32 %v963, %v965
        %v967 = vrot.slane %v953, %v966
        %v968 = vcombine.high %v960, 0
        %v969 = vcombine.high %v967, 0
        %v972 = vunpack.c.l.s4 1983009808
        %v973 = vunpack.c.0.s8 %v972
        %v974 = vlaneseq
        %v975 = vshrl.u32 %v974, 7
        %v976 = vsub.s32 %v973, %v975
        %v977 = vrot.slane %v932, %v976
        %v980 = vunpack.c.l.s4 1983009808
        %v981 = vunpack.c.0.s8 %v980
        %v982 = vlaneseq
        %v983 = vshrl.u32 %v982, 7
        %v984 = vsub.s32 %v981, %v983
        %v985 = vrot.slane %v936, %v984
        %v986 = vcombine.low %v977, %v985
        %v987 = vcombine.high %v977, %v985
        %v989 = vunpack.c.l.s4 1934713408
        %v990 = vunpack.c.0.s8 %v989
        %v991 = vlaneseq
        %v992 = vshrl.u32 %v991, 7
        %v993 = vsub.s32 %v990, %v992
        %v994 = vrot.slane %v986, %v993
        %v996 = vunpack.c.l.s4 1934713408
        %v997 = vunpack.c.0.s8 %v996
        %v998 = vlaneseq
        %v999 = vshrl.u32 %v998, 7
        %v1000 = vsub.s32 %v997, %v999
        %v1001 = vrot.slane %v987, %v1000
        %v1002 = vcombine.high %v994, 0
        %v1003 = vcombine.high %v1001, 0
        %v1006 = vpack.i.b16 %v994, %v960
        %v1008 = vshrl.u32 %v960, 16
        %v1009 = vshrl.u32 %v994, 16
        %v1010 = vpack.i.b16 %v1009, %v1008
        %v1014 = vpack.i.b16 %v1002, %v968
        %v1016 = vshrl.u32 %v968, 16
        %v1017 = vshrl.u32 %v1002, 16
        %v1018 = vpack.i.b16 %v1017, %v1016
        %v1022 = vpack.i.b16 %v1001, %v967
        %v1024 = vshrl.u32 %v967, 16
        %v1025 = vshrl.u32 %v1001, 16
        %v1026 = vpack.i.b16 %v1025, %v1024
        %v1030 = vpack.i.b16 %v1003, %v969
        %v1032 = vshrl.u32 %v969, 16
        %v1033 = vshrl.u32 %v1003, 16
        %v1034 = vpack.i.b16 %v1033, %v1032
        %v1036 = vcombine.low %v1006, %v1022
        %v1038 = vunpack.c.l.s4 1983009808
        %v1039 = vunpack.c.0.s8 %v1038
        %v1040 = vlaneseq
        %v1041 = vshrl.u32 %v1040, 7
        %v1042 = vsub.s32 %v1039, %v1041
        %v1043 = vrot.slane %v1036, %v1042
        %v1044 = vcombine.low %v1014, %v1030
        %v1046 = vunpack.c.l.s4 1983009808
        %v1047 = vunpack.c.0.s8 %v1046
        %v1048 = vlaneseq
        %v1049 = vshrl.u32 %v1048, 7
        %v1050 = vsub.s32 %v1047, %v1049
        %v1051 = vrot.slane %v1044, %v1050
        %v1052 = vcombine.low %v1043, %v1051
        %v1054 = vunpack.c.l.s4 1934713408
        %v1055 = vunpack.c.0.s8 %v1054
        %v1056 = vlaneseq
        %v1057 = vshrl.u32 %v1056, 7
        %v1058 = vsub.s32 %v1055, %v1057
        %v1059 = vrot.slane %v1052, %v1058
        %v1060 = vcombine.high %v1059, 0
        %v1061 = vcombine.low %v1010, %v1026
        %v1063 = vunpack.c.l.s4 1983009808
        %v1064 = vunpack.c.0.s8 %v1063
        %v1065 = vlaneseq
        %v1066 = vshrl.u32 %v1065, 7
        %v1067 = vsub.s32 %v1064, %v1066
        %v1068 = vrot.slane %v1061, %v1067
        %v1069 = vcombine.low %v1018, %v1034
        %v1071 = vunpack.c.l.s4 1983009808
        %v1072 = vunpack.c.0.s8 %v1071
        %v1073 = vlaneseq
        %v1074 = vshrl.u32 %v1073, 7
        %v1075 = vsub.s32 %v1072, %v1074
        %v1076 = vrot.slane %v1069, %v1075
        %v1077 = vcombine.low %v1068, %v1076
        %v1079 = vunpack.c.l.s4 1934713408
        %v1080 = vunpack.c.0.s8 %v1079
        %v1081 = vlaneseq
        %v1082 = vshrl.u32 %v1081, 7
        %v1083 = vsub.s32 %v1080, %v1082
        %v1084 = vrot.slane %v1077, %v1083
        %v1085 = vcombine.high %v1084, 0
        %v1088 = vpack.i.b16 %v1084, %v1059
        %v1089 = vshrl.u32 %v1059, 16
        %v1090 = vshrl.u32 %v1084, 16
        %v1091 = vpack.i.b16 %v1090, %v1089
        %v1094 = vpack.i.b16 %v1085, %v1060
        %v1095 = vshrl.u32 %v1060, 16
        %v1096 = vshrl.u32 %v1085, 16
        %v1097 = vpack.i.b16 %v1096, %v1095
        %v1098 = vpack.c.bf16 %v755, %v755
        %1100 = vrot.lane.b32.xlu0 %v1098, 120
        %v1101 = vpop.permute.xlu0 %1100
        %1102 = vrot.lane.b32.xlu0 %v1098, 112
        %v1103 = vpop.permute.xlu0 %1102
        %1104 = vrot.lane.b32.xlu0 %v1098, 104
        %v1105 = vpop.permute.xlu0 %1104
        %v1107 = vunpack.c.l.s4 1983009808
        %v1108 = vunpack.c.0.s8 %v1107
        %v1109 = vlaneseq
        %v1110 = vshrl.u32 %v1109, 7
        %v1111 = vsub.s32 %v1108, %v1110
        %v1112 = vrot.slane %v1098, %v1111
        %v1115 = vunpack.c.l.s4 1983009808
        %v1116 = vunpack.c.0.s8 %v1115
        %v1117 = vlaneseq
        %v1118 = vshrl.u32 %v1117, 7
        %v1119 = vsub.s32 %v1116, %v1118
        %v1120 = vrot.slane %v1103, %v1119
        %v1121 = vcombine.low %v1112, %v1120
        %v1122 = vcombine.high %v1112, %v1120
        %v1124 = vunpack.c.l.s4 1934713408
        %v1125 = vunpack.c.0.s8 %v1124
        %v1126 = vlaneseq
        %v1127 = vshrl.u32 %v1126, 7
        %v1128 = vsub.s32 %v1125, %v1127
        %v1129 = vrot.slane %v1121, %v1128
        %v1131 = vunpack.c.l.s4 1934713408
        %v1132 = vunpack.c.0.s8 %v1131
        %v1133 = vlaneseq
        %v1134 = vshrl.u32 %v1133, 7
        %v1135 = vsub.s32 %v1132, %v1134
        %v1136 = vrot.slane %v1122, %v1135
        %v1137 = vcombine.high %v1129, 0
        %v1138 = vcombine.high %v1136, 0
        %v1141 = vunpack.c.l.s4 1983009808
        %v1142 = vunpack.c.0.s8 %v1141
        %v1143 = vlaneseq
        %v1144 = vshrl.u32 %v1143, 7
        %v1145 = vsub.s32 %v1142, %v1144
        %v1146 = vrot.slane %v1101, %v1145
        %v1149 = vunpack.c.l.s4 1983009808
        %v1150 = vunpack.c.0.s8 %v1149
        %v1151 = vlaneseq
        %v1152 = vshrl.u32 %v1151, 7
        %v1153 = vsub.s32 %v1150, %v1152
        %v1154 = vrot.slane %v1105, %v1153
        %v1155 = vcombine.low %v1146, %v1154
        %v1156 = vcombine.high %v1146, %v1154
        %v1158 = vunpack.c.l.s4 1934713408
        %v1159 = vunpack.c.0.s8 %v1158
        %v1160 = vlaneseq
        %v1161 = vshrl.u32 %v1160, 7
        %v1162 = vsub.s32 %v1159, %v1161
        %v1163 = vrot.slane %v1155, %v1162
        %v1165 = vunpack.c.l.s4 1934713408
        %v1166 = vunpack.c.0.s8 %v1165
        %v1167 = vlaneseq
        %v1168 = vshrl.u32 %v1167, 7
        %v1169 = vsub.s32 %v1166, %v1168
        %v1170 = vrot.slane %v1156, %v1169
        %v1171 = vcombine.high %v1163, 0
        %v1172 = vcombine.high %v1170, 0
        %v1175 = vpack.i.b16 %v1163, %v1129
        %v1177 = vshrl.u32 %v1129, 16
        %v1178 = vshrl.u32 %v1163, 16
        %v1179 = vpack.i.b16 %v1178, %v1177
        %v1183 = vpack.i.b16 %v1171, %v1137
        %v1185 = vshrl.u32 %v1137, 16
        %v1186 = vshrl.u32 %v1171, 16
        %v1187 = vpack.i.b16 %v1186, %v1185
        %v1191 = vpack.i.b16 %v1170, %v1136
        %v1193 = vshrl.u32 %v1136, 16
        %v1194 = vshrl.u32 %v1170, 16
        %v1195 = vpack.i.b16 %v1194, %v1193
        %v1199 = vpack.i.b16 %v1172, %v1138
        %v1201 = vshrl.u32 %v1138, 16
        %v1202 = vshrl.u32 %v1172, 16
        %v1203 = vpack.i.b16 %v1202, %v1201
        %v1205 = vcombine.low %v1175, %v1191
        %v1207 = vunpack.c.l.s4 1983009808
        %v1208 = vunpack.c.0.s8 %v1207
        %v1209 = vlaneseq
        %v1210 = vshrl.u32 %v1209, 7
        %v1211 = vsub.s32 %v1208, %v1210
        %v1212 = vrot.slane %v1205, %v1211
        %v1213 = vcombine.low %v1183, %v1199
        %v1215 = vunpack.c.l.s4 1983009808
        %v1216 = vunpack.c.0.s8 %v1215
        %v1217 = vlaneseq
        %v1218 = vshrl.u32 %v1217, 7
        %v1219 = vsub.s32 %v1216, %v1218
        %v1220 = vrot.slane %v1213, %v1219
        %v1221 = vcombine.low %v1212, %v1220
        %v1223 = vunpack.c.l.s4 1934713408
        %v1224 = vunpack.c.0.s8 %v1223
        %v1225 = vlaneseq
        %v1226 = vshrl.u32 %v1225, 7
        %v1227 = vsub.s32 %v1224, %v1226
        %v1228 = vrot.slane %v1221, %v1227
        %v1229 = vcombine.high %v1228, 0
        %v1230 = vcombine.low %v1179, %v1195
        %v1232 = vunpack.c.l.s4 1983009808
        %v1233 = vunpack.c.0.s8 %v1232
        %v1234 = vlaneseq
        %v1235 = vshrl.u32 %v1234, 7
        %v1236 = vsub.s32 %v1233, %v1235
        %v1237 = vrot.slane %v1230, %v1236
        %v1238 = vcombine.low %v1187, %v1203
        %v1240 = vunpack.c.l.s4 1983009808
        %v1241 = vunpack.c.0.s8 %v1240
        %v1242 = vlaneseq
        %v1243 = vshrl.u32 %v1242, 7
        %v1244 = vsub.s32 %v1241, %v1243
        %v1245 = vrot.slane %v1238, %v1244
        %v1246 = vcombine.low %v1237, %v1245
        %v1248 = vunpack.c.l.s4 1934713408
        %v1249 = vunpack.c.0.s8 %v1248
        %v1250 = vlaneseq
        %v1251 = vshrl.u32 %v1250, 7
        %v1252 = vsub.s32 %v1249, %v1251
        %v1253 = vrot.slane %v1246, %v1252
        %v1254 = vcombine.high %v1253, 0
        %v1257 = vpack.i.b16 %v1253, %v1228
        %v1258 = vshrl.u32 %v1228, 16
        %v1259 = vshrl.u32 %v1253, 16
        %v1260 = vpack.i.b16 %v1259, %v1258
        %v1263 = vpack.i.b16 %v1254, %v1229
        %v1264 = vshrl.u32 %v1229, 16
        %v1265 = vshrl.u32 %v1254, 16
        %v1266 = vpack.i.b16 %v1265, %v1264
        %vm1267 = vcmask 64512
        %v1269 = vsel %vm1267, %v919, 0
        %v1272 = vsel %vm1267, %v1088, 0
        %1274 = vmatprep.subr.bf16.mxu0 0
        %1275 = vmatpush1.bf16.xpose.msra.mxu0 0
        %1276 = vmatprep.subr.bf16.mxu0 0
        %1277 = vmatpush1.bf16.xpose.msra.mxu0 0
        %1278 = vmatprep.subr.bf16.mxu0 0
        %1279 = vmatpush1.bf16.xpose.msra.mxu0 0
        %1280 = vmatprep.subr.bf16.mxu0 0
        %1281 = vmatpush1.bf16.xpose.msra.mxu0 0
        %1282 = vmatprep.subr.bf16.mxu0 0
        %1283 = vmatpush1.bf16.xpose.msra.mxu0 0
        %1284 = vmatprep.subr.bf16.mxu0 0
        %1285 = vmatpush1.bf16.xpose.msra.mxu0 0
        %1286 = vmatprep.subr.bf16.mxu0 0
        %1287 = vmatpush1.bf16.xpose.msra.mxu0 0
        %1288 = vmatprep.subr.bf16.mxu0 0
        %1289 = vmatpush1.bf16.xpose.msra.mxu0 %v1272
        %1290 = vmatprep.subr.bf16.mxu0 0
        %1291 = vmatpush2.bf16.xpose.msra.mxu0 0
        %1292 = vmatprep.subr.bf16.mxu0 0
        %1293 = vmatpush2.bf16.xpose.msra.mxu0 0
        %1294 = vmatprep.subr.bf16.mxu0 0
        %1295 = vmatpush2.bf16.xpose.msra.mxu0 0
        %1296 = vmatprep.subr.bf16.mxu0 0
        %1297 = vmatpush2.bf16.xpose.msra.mxu0 0
        %1298 = vmatprep.subr.bf16.mxu0 0
        %1299 = vmatpush2.bf16.xpose.msra.mxu0 0
        %1300 = vmatprep.subr.bf16.mxu0 0
        %1301 = vmatpush2.bf16.xpose.msra.mxu0 0
        %1302 = vmatprep.subr.bf16.mxu0 0
        %1303 = vmatpush2.bf16.xpose.msra.mxu0 0
        %1304 = vmatprep.subr.bf16.mxu0 0
        %1305 = vmatpush2.bf16.xpose.msra.mxu0 0
        %1306 = vmatprep.mubr.bf16.mxu0 0
        %1307 = vmatmul.mubr.bf16.gmra.mxu0 %v1269
        %v1308 = vpop.f32.mrf.mxu0
        %v1309 = vadd.f32 0.0, %v1308
        %v1310 = vpop.f32.mrf.mxu0
        %v1311 = vpop.f32.mrf.mxu0
        %v1312 = vpop.f32.mrf.mxu0
        %1313 = vdwg.mxu0
        %v1315 = vsel %vm1267, %v922, 0
        %v1318 = vsel %vm1267, %v1091, 0
        %1320 = vmatprep.subr.bf16.mxu0 0
        %1321 = vmatpush1.bf16.xpose.msra.mxu0 0
        %1322 = vmatprep.subr.bf16.mxu0 0
        %1323 = vmatpush1.bf16.xpose.msra.mxu0 0
        %1324 = vmatprep.subr.bf16.mxu0 0
        %1325 = vmatpush1.bf16.xpose.msra.mxu0 0
        %1326 = vmatprep.subr.bf16.mxu0 0
        %1327 = vmatpush1.bf16.xpose.msra.mxu0 0
        %1328 = vmatprep.subr.bf16.mxu0 0
        %1329 = vmatpush1.bf16.xpose.msra.mxu0 0
        %1330 = vmatprep.subr.bf16.mxu0 0
        %1331 = vmatpush1.bf16.xpose.msra.mxu0 0
        %1332 = vmatprep.subr.bf16.mxu0 0
        %1333 = vmatpush1.bf16.xpose.msra.mxu0 0
        %1334 = vmatprep.subr.bf16.mxu0 0
        %1335 = vmatpush1.bf16.xpose.msra.mxu0 %v1318
        %1336 = vmatprep.subr.bf16.mxu0 0
        %1337 = vmatpush2.bf16.xpose.msra.mxu0 0
        %1338 = vmatprep.subr.bf16.mxu0 0
        %1339 = vmatpush2.bf16.xpose.msra.mxu0 0
        %1340 = vmatprep.subr.bf16.mxu0 0
        %1341 = vmatpush2.bf16.xpose.msra.mxu0 0
        %1342 = vmatprep.subr.bf16.mxu0 0
        %1343 = vmatpush2.bf16.xpose.msra.mxu0 0
        %1344 = vmatprep.subr.bf16.mxu0 0
        %1345 = vmatpush2.bf16.xpose.msra.mxu0 0
        %1346 = vmatprep.subr.bf16.mxu0 0
        %1347 = vmatpush2.bf16.xpose.msra.mxu0 0
        %1348 = vmatprep.subr.bf16.mxu0 0
        %1349 = vmatpush2.bf16.xpose.msra.mxu0 0
        %1350 = vmatprep.subr.bf16.mxu0 0
        %1351 = vmatpush2.bf16.xpose.msra.mxu0 0
        %1352 = vmatprep.mubr.bf16.mxu0 0
        %1353 = vmatmul.mubr.bf16.gmra.mxu0 %v1315
        %v1354 = vpop.f32.mrf.mxu0
        %v1355 = vadd.f32 0.0, %v1354
        %v1356 = vpop.f32.mrf.mxu0
        %v1357 = vpop.f32.mrf.mxu0
        %v1358 = vpop.f32.mrf.mxu0
        %1359 = vdwg.mxu0
        %v1361 = vsel %vm1267, %v925, 0
        %v1364 = vsel %vm1267, %v1094, 0
        %1366 = vmatprep.subr.bf16.mxu0 0
        %1367 = vmatpush1.bf16.xpose.msra.mxu0 0
        %1368 = vmatprep.subr.bf16.mxu0 0
        %1369 = vmatpush1.bf16.xpose.msra.mxu0 0
        %1370 = vmatprep.subr.bf16.mxu0 0
        %1371 = vmatpush1.bf16.xpose.msra.mxu0 0
        %1372 = vmatprep.subr.bf16.mxu0 0
        %1373 = vmatpush1.bf16.xpose.msra.mxu0 0
        %1374 = vmatprep.subr.bf16.mxu0 0
        %1375 = vmatpush1.bf16.xpose.msra.mxu0 0
        %1376 = vmatprep.subr.bf16.mxu0 0
        %1377 = vmatpush1.bf16.xpose.msra.mxu0 0
        %1378 = vmatprep.subr.bf16.mxu0 0
        %1379 = vmatpush1.bf16.xpose.msra.mxu0 0
        %1380 = vmatprep.subr.bf16.mxu0 0
        %1381 = vmatpush1.bf16.xpose.msra.mxu0 %v1364
        %1382 = vmatprep.subr.bf16.mxu0 0
        %1383 = vmatpush2.bf16.xpose.msra.mxu0 0
        %1384 = vmatprep.subr.bf16.mxu0 0
        %1385 = vmatpush2.bf16.xpose.msra.mxu0 0
        %1386 = vmatprep.subr.bf16.mxu0 0
        %1387 = vmatpush2.bf16.xpose.msra.mxu0 0
        %1388 = vmatprep.subr.bf16.mxu0 0
        %1389 = vmatpush2.bf16.xpose.msra.mxu0 0
        %1390 = vmatprep.subr.bf16.mxu0 0
        %1391 = vmatpush2.bf16.xpose.msra.mxu0 0
        %1392 = vmatprep.subr.bf16.mxu0 0
        %1393 = vmatpush2.bf16.xpose.msra.mxu0 0
        %1394 = vmatprep.subr.bf16.mxu0 0
        %1395 = vmatpush2.bf16.xpose.msra.mxu0 0
        %1396 = vmatprep.subr.bf16.mxu0 0
        %1397 = vmatpush2.bf16.xpose.msra.mxu0 0
        %1398 = vmatprep.mubr.bf16.mxu0 0
        %1399 = vmatmul.mubr.bf16.gmra.mxu0 %v1361
        %v1400 = vpop.f32.mrf.mxu0
        %v1401 = vadd.f32 0.0, %v1400
        %v1402 = vpop.f32.mrf.mxu0
        %v1403 = vpop.f32.mrf.mxu0
        %v1404 = vpop.f32.mrf.mxu0
        %1405 = vdwg.mxu0
        %v1407 = vsel %vm1267, %v928, 0
        %v1410 = vsel %vm1267, %v1097, 0
        %1412 = vmatprep.subr.bf16.mxu0 0
        %1413 = vmatpush1.bf16.xpose.msra.mxu0 0
        %1414 = vmatprep.subr.bf16.mxu0 0
        %1415 = vmatpush1.bf16.xpose.msra.mxu0 0
        %1416 = vmatprep.subr.bf16.mxu0 0
        %1417 = vmatpush1.bf16.xpose.msra.mxu0 0
        %1418 = vmatprep.subr.bf16.mxu0 0
        %1419 = vmatpush1.bf16.xpose.msra.mxu0 0
        %1420 = vmatprep.subr.bf16.mxu0 0
        %1421 = vmatpush1.bf16.xpose.msra.mxu0 0
        %1422 = vmatprep.subr.bf16.mxu0 0
        %1423 = vmatpush1.bf16.xpose.msra.mxu0 0
        %1424 = vmatprep.subr.bf16.mxu0 0
        %1425 = vmatpush1.bf16.xpose.msra.mxu0 0
        %1426 = vmatprep.subr.bf16.mxu0 0
        %1427 = vmatpush1.bf16.xpose.msra.mxu0 %v1410
        %1428 = vmatprep.subr.bf16.mxu0 0
        %1429 = vmatpush2.bf16.xpose.msra.mxu0 0
        %1430 = vmatprep.subr.bf16.mxu0 0
        %1431 = vmatpush2.bf16.xpose.msra.mxu0 0
        %1432 = vmatprep.subr.bf16.mxu0 0
        %1433 = vmatpush2.bf16.xpose.msra.mxu0 0
        %1434 = vmatprep.subr.bf16.mxu0 0
        %1435 = vmatpush2.bf16.xpose.msra.mxu0 0
        %1436 = vmatprep.subr.bf16.mxu0 0
        %1437 = vmatpush2.bf16.xpose.msra.mxu0 0
        %1438 = vmatprep.subr.bf16.mxu0 0
        %1439 = vmatpush2.bf16.xpose.msra.mxu0 0
        %1440 = vmatprep.subr.bf16.mxu0 0
        %1441 = vmatpush2.bf16.xpose.msra.mxu0 0
        %1442 = vmatprep.subr.bf16.mxu0 0
        %1443 = vmatpush2.bf16.xpose.msra.mxu0 0
        %1444 = vmatprep.mubr.bf16.mxu0 0
        %1445 = vmatmul.mubr.bf16.gmra.mxu0 %v1407
        %v1446 = vpop.f32.mrf.mxu0
        %v1447 = vadd.f32 0.0, %v1446
        %v1448 = vpop.f32.mrf.mxu0
        %v1449 = vpop.f32.mrf.mxu0
        %v1450 = vpop.f32.mrf.mxu0
        %1451 = vdwg.mxu0
        %v1452 = vsel %vm1267, %v1309, -inf
        %1453 = vmax.xlane.f32.xlu0 %v1452
        %v1454 = vpop.xlane.xlu0 %1453
        %v1455 = vsel %vm1267, %v1355, -inf
        %1456 = vmax.xlane.f32.xlu0 %v1455
        %v1457 = vpop.xlane.xlu0 %1456
        %v1458 = vsel %vm1267, %v1401, -inf
        %1459 = vmax.xlane.f32.xlu0 %v1458
        %v1460 = vpop.xlane.xlu0 %1459
        %v1461 = vsel %vm1267, %v1447, -inf
        %1462 = vmax.xlane.f32.xlu0 %v1461
        %v1463 = vpop.xlane.xlu0 %1462
        %v1464 = vsub.f32 %v1309, %v1454
        %v1465 = vsub.f32 %v1355, %v1457
        %v1466 = vsub.f32 %v1401, %v1460
        %v1467 = vsub.f32 %v1447, %v1463
        %v1468 = vmul.f32 %v1464, 1.442695
        %v1469 = vpow.pop %v1468
        %v1470 = vmul.f32 %v1465, 1.442695
        %v1471 = vpow.pop %v1470
        %v1472 = vmul.f32 %v1466, 1.442695
        %v1473 = vpow.pop %v1472
        %v1474 = vmul.f32 %v1467, 1.442695
        %v1475 = vpow.pop %v1474
        %v1476 = vsel %vm1267, %v1469, 0.0
        %1477 = vadd.xlane.f32.xlu0 %v1476
        %v1478 = vpop.xlane.xlu0 %1477
        %v1479 = vsel %vm1267, %v1471, 0.0
        %1480 = vadd.xlane.f32.xlu0 %v1479
        %v1481 = vpop.xlane.xlu0 %1480
        %v1482 = vsel %vm1267, %v1473, 0.0
        %1483 = vadd.xlane.f32.xlu0 %v1482
        %v1484 = vpop.xlane.xlu0 %1483
        %v1485 = vsel %vm1267, %v1475, 0.0
        %1486 = vadd.xlane.f32.xlu0 %v1485
        %v1487 = vpop.xlane.xlu0 %1486
        %v1488 = vrcp.pop %v1478
        %v1489 = vrcp.pop %v1481
        %v1490 = vrcp.pop %v1484
        %v1491 = vrcp.pop %v1487
        %v1492 = vmul.f32 %v1469, %v1488
        %v1493 = vmul.f32 %v1471, %v1489
        %v1494 = vmul.f32 %v1473, %v1490
        %v1495 = vmul.f32 %v1475, %v1491
        %v1496 = vpack.c.bf16 %v1492, %v1492
        %v1497 = vpack.c.bf16 %v1493, %v1493
        %v1498 = vpack.c.bf16 %v1494, %v1494
        %v1499 = vpack.c.bf16 %v1495, %v1495
        %v1501 = vsel %vm1267, %v1496, 0
        %vm1503 = vcmask 1043456
        %v1505 = vsel %vm1503, %v1257, 0
        %1507 = vmatprep.subr.bf16.mxu0 0
        %1508 = vmatpush1.bf16.msra.mxu0 0
        %1509 = vmatprep.subr.bf16.mxu0 0
        %1510 = vmatpush1.bf16.msra.mxu0 0
        %1511 = vmatprep.subr.bf16.mxu0 0
        %1512 = vmatpush1.bf16.msra.mxu0 0
        %1513 = vmatprep.subr.bf16.mxu0 0
        %1514 = vmatpush1.bf16.msra.mxu0 0
        %1515 = vmatprep.subr.bf16.mxu0 0
        %1516 = vmatpush1.bf16.msra.mxu0 0
        %1517 = vmatprep.subr.bf16.mxu0 0
        %1518 = vmatpush1.bf16.msra.mxu0 0
        %1519 = vmatprep.subr.bf16.mxu0 0
        %1520 = vmatpush1.bf16.msra.mxu0 0
        %1521 = vmatprep.subr.bf16.mxu0 0
        %1522 = vmatpush1.bf16.msra.mxu0 %v1505
        %1523 = vmatprep.subr.bf16.mxu0 0
        %1524 = vmatpush2.bf16.msra.mxu0 0
        %1525 = vmatprep.subr.bf16.mxu0 0
        %1526 = vmatpush2.bf16.msra.mxu0 0
        %1527 = vmatprep.subr.bf16.mxu0 0
        %1528 = vmatpush2.bf16.msra.mxu0 0
        %1529 = vmatprep.subr.bf16.mxu0 0
        %1530 = vmatpush2.bf16.msra.mxu0 0
        %1531 = vmatprep.subr.bf16.mxu0 0
        %1532 = vmatpush2.bf16.msra.mxu0 0
        %1533 = vmatprep.subr.bf16.mxu0 0
        %1534 = vmatpush2.bf16.msra.mxu0 0
        %1535 = vmatprep.subr.bf16.mxu0 0
        %1536 = vmatpush2.bf16.msra.mxu0 0
        %1537 = vmatprep.subr.bf16.mxu0 0
        %1538 = vmatpush2.bf16.msra.mxu0 0
        %1539 = vmatprep.mubr.bf16.mxu0 0
        %1540 = vmatmul.mubr.bf16.gmra.mxu0 %v1501
        %v1541 = vpop.f32.mrf.mxu0
        %v1542 = vadd.f32 0.0, %v1541
        %v1543 = vpop.f32.mrf.mxu0
        %v1544 = vpop.f32.mrf.mxu0
        %v1545 = vpop.f32.mrf.mxu0
        %1546 = vdwg.mxu0
        %v1548 = vsel %vm1267, %v1497, 0
        %v1551 = vsel %vm1503, %v1260, 0
        %1553 = vmatprep.subr.bf16.mxu0 0
        %1554 = vmatpush1.bf16.msra.mxu0 0
        %1555 = vmatprep.subr.bf16.mxu0 0
        %1556 = vmatpush1.bf16.msra.mxu0 0
        %1557 = vmatprep.subr.bf16.mxu0 0
        %1558 = vmatpush1.bf16.msra.mxu0 0
        %1559 = vmatprep.subr.bf16.mxu0 0
        %1560 = vmatpush1.bf16.msra.mxu0 0
        %1561 = vmatprep.subr.bf16.mxu0 0
        %1562 = vmatpush1.bf16.msra.mxu0 0
        %1563 = vmatprep.subr.bf16.mxu0 0
        %1564 = vmatpush1.bf16.msra.mxu0 0
        %1565 = vmatprep.subr.bf16.mxu0 0
        %1566 = vmatpush1.bf16.msra.mxu0 0
        %1567 = vmatprep.subr.bf16.mxu0 0
        %1568 = vmatpush1.bf16.msra.mxu0 %v1551
        %1569 = vmatprep.subr.bf16.mxu0 0
        %1570 = vmatpush2.bf16.msra.mxu0 0
        %1571 = vmatprep.subr.bf16.mxu0 0
        %1572 = vmatpush2.bf16.msra.mxu0 0
        %1573 = vmatprep.subr.bf16.mxu0 0
        %1574 = vmatpush2.bf16.msra.mxu0 0
        %1575 = vmatprep.subr.bf16.mxu0 0
        %1576 = vmatpush2.bf16.msra.mxu0 0
        %1577 = vmatprep.subr.bf16.mxu0 0
        %1578 = vmatpush2.bf16.msra.mxu0 0
        %1579 = vmatprep.subr.bf16.mxu0 0
        %1580 = vmatpush2.bf16.msra.mxu0 0
        %1581 = vmatprep.subr.bf16.mxu0 0
        %1582 = vmatpush2.bf16.msra.mxu0 0
        %1583 = vmatprep.subr.bf16.mxu0 0
        %1584 = vmatpush2.bf16.msra.mxu0 0
        %1585 = vmatprep.mubr.bf16.mxu0 0
        %1586 = vmatmul.mubr.bf16.gmra.mxu0 %v1548
        %v1587 = vpop.f32.mrf.mxu0
        %v1588 = vadd.f32 0.0, %v1587
        %v1589 = vpop.f32.mrf.mxu0
        %v1590 = vpop.f32.mrf.mxu0
        %v1591 = vpop.f32.mrf.mxu0
        %1592 = vdwg.mxu0
        %v1594 = vsel %vm1267, %v1498, 0
        %v1597 = vsel %vm1503, %v1263, 0
        %1599 = vmatprep.subr.bf16.mxu0 0
        %1600 = vmatpush1.bf16.msra.mxu0 0
        %1601 = vmatprep.subr.bf16.mxu0 0
        %1602 = vmatpush1.bf16.msra.mxu0 0
        %1603 = vmatprep.subr.bf16.mxu0 0
        %1604 = vmatpush1.bf16.msra.mxu0 0
        %1605 = vmatprep.subr.bf16.mxu0 0
        %1606 = vmatpush1.bf16.msra.mxu0 0
        %1607 = vmatprep.subr.bf16.mxu0 0
        %1608 = vmatpush1.bf16.msra.mxu0 0
        %1609 = vmatprep.subr.bf16.mxu0 0
        %1610 = vmatpush1.bf16.msra.mxu0 0
        %1611 = vmatprep.subr.bf16.mxu0 0
        %1612 = vmatpush1.bf16.msra.mxu0 0
        %1613 = vmatprep.subr.bf16.mxu0 0
        %1614 = vmatpush1.bf16.msra.mxu0 %v1597
        %1615 = vmatprep.subr.bf16.mxu0 0
        %1616 = vmatpush2.bf16.msra.mxu0 0
        %1617 = vmatprep.subr.bf16.mxu0 0
        %1618 = vmatpush2.bf16.msra.mxu0 0
        %1619 = vmatprep.subr.bf16.mxu0 0
        %1620 = vmatpush2.bf16.msra.mxu0 0
        %1621 = vmatprep.subr.bf16.mxu0 0
        %1622 = vmatpush2.bf16.msra.mxu0 0
        %1623 = vmatprep.subr.bf16.mxu0 0
        %1624 = vmatpush2.bf16.msra.mxu0 0
        %1625 = vmatprep.subr.bf16.mxu0 0
        %1626 = vmatpush2.bf16.msra.mxu0 0
        %1627 = vmatprep.subr.bf16.mxu0 0
        %1628 = vmatpush2.bf16.msra.mxu0 0
        %1629 = vmatprep.subr.bf16.mxu0 0
        %1630 = vmatpush2.bf16.msra.mxu0 0
        %1631 = vmatprep.mubr.bf16.mxu0 0
        %1632 = vmatmul.mubr.bf16.gmra.mxu0 %v1594
        %v1633 = vpop.f32.mrf.mxu0
        %v1634 = vadd.f32 0.0, %v1633
        %v1635 = vpop.f32.mrf.mxu0
        %v1636 = vpop.f32.mrf.mxu0
        %v1637 = vpop.f32.mrf.mxu0
        %1638 = vdwg.mxu0
        %v1640 = vsel %vm1267, %v1499, 0
        %v1643 = vsel %vm1503, %v1266, 0
        %1645 = vmatprep.subr.bf16.mxu0 0
        %1646 = vmatpush1.bf16.msra.mxu0 0
        %1647 = vmatprep.subr.bf16.mxu0 0
        %1648 = vmatpush1.bf16.msra.mxu0 0
        %1649 = vmatprep.subr.bf16.mxu0 0
        %1650 = vmatpush1.bf16.msra.mxu0 0
        %1651 = vmatprep.subr.bf16.mxu0 0
        %1652 = vmatpush1.bf16.msra.mxu0 0
        %1653 = vmatprep.subr.bf16.mxu0 0
        %1654 = vmatpush1.bf16.msra.mxu0 0
        %1655 = vmatprep.subr.bf16.mxu0 0
        %1656 = vmatpush1.bf16.msra.mxu0 0
        %1657 = vmatprep.subr.bf16.mxu0 0
        %1658 = vmatpush1.bf16.msra.mxu0 0
        %1659 = vmatprep.subr.bf16.mxu0 0
        %1660 = vmatpush1.bf16.msra.mxu0 %v1643
        %1661 = vmatprep.subr.bf16.mxu0 0
        %1662 = vmatpush2.bf16.msra.mxu0 0
        %1663 = vmatprep.subr.bf16.mxu0 0
        %1664 = vmatpush2.bf16.msra.mxu0 0
        %1665 = vmatprep.subr.bf16.mxu0 0
        %1666 = vmatpush2.bf16.msra.mxu0 0
        %1667 = vmatprep.subr.bf16.mxu0 0
        %1668 = vmatpush2.bf16.msra.mxu0 0
        %1669 = vmatprep.subr.bf16.mxu0 0
        %1670 = vmatpush2.bf16.msra.mxu0 0
        %1671 = vmatprep.subr.bf16.mxu0 0
        %1672 = vmatpush2.bf16.msra.mxu0 0
        %1673 = vmatprep.subr.bf16.mxu0 0
        %1674 = vmatpush2.bf16.msra.mxu0 0
        %1675 = vmatprep.subr.bf16.mxu0 0
        %1676 = vmatpush2.bf16.msra.mxu0 0
        %1677 = vmatprep.mubr.bf16.mxu0 0
        %1678 = vmatmul.mubr.bf16.gmra.mxu0 %v1640
        %v1679 = vpop.f32.mrf.mxu0
        %v1680 = vadd.f32 0.0, %v1679
        %v1681 = vpop.f32.mrf.mxu0
        %v1682 = vpop.f32.mrf.mxu0
        %v1683 = vpop.f32.mrf.mxu0
        %1684 = vdwg.mxu0
        %v1685 = vpack.c.bf16 %v1542, %v1542
        %v1687 = vunpack.c.l.s4 1983009808
        %v1688 = vunpack.c.0.s8 %v1687
        %v1689 = vlaneseq
        %v1690 = vshrl.u32 %v1689, 7
        %v1691 = vsub.s32 %v1688, %v1690
        %v1692 = vrot.slane %v1685, %v1691
        %v1693 = vpack.c.bf16 %v1634, %v1634
        %v1695 = vunpack.c.l.s4 1983009808
        %v1696 = vunpack.c.0.s8 %v1695
        %v1697 = vlaneseq
        %v1698 = vshrl.u32 %v1697, 7
        %v1699 = vsub.s32 %v1696, %v1698
        %v1700 = vrot.slane %v1693, %v1699
        %v1701 = vcombine.low %v1692, %v1700
        %v1702 = vcombine.high %v1692, %v1700
        %v1704 = vunpack.c.l.s4 1934713408
        %v1705 = vunpack.c.0.s8 %v1704
        %v1706 = vlaneseq
        %v1707 = vshrl.u32 %v1706, 7
        %v1708 = vsub.s32 %v1705, %v1707
        %v1709 = vrot.slane %v1701, %v1708
        %v1711 = vunpack.c.l.s4 1934713408
        %v1712 = vunpack.c.0.s8 %v1711
        %v1713 = vlaneseq
        %v1714 = vshrl.u32 %v1713, 7
        %v1715 = vsub.s32 %v1712, %v1714
        %v1716 = vrot.slane %v1702, %v1715
        %v1717 = vcombine.high %v1709, 0
        %v1718 = vcombine.high %v1716, 0
        %v1719 = vpack.c.bf16 %v1588, %v1588
        %v1721 = vunpack.c.l.s4 1983009808
        %v1722 = vunpack.c.0.s8 %v1721
        %v1723 = vlaneseq
        %v1724 = vshrl.u32 %v1723, 7
        %v1725 = vsub.s32 %v1722, %v1724
        %v1726 = vrot.slane %v1719, %v1725
        %v1727 = vpack.c.bf16 %v1680, %v1680
        %v1729 = vunpack.c.l.s4 1983009808
        %v1730 = vunpack.c.0.s8 %v1729
        %v1731 = vlaneseq
        %v1732 = vshrl.u32 %v1731, 7
        %v1733 = vsub.s32 %v1730, %v1732
        %v1734 = vrot.slane %v1727, %v1733
        %v1735 = vcombine.low %v1726, %v1734
        %v1736 = vcombine.high %v1726, %v1734
        %v1738 = vunpack.c.l.s4 1934713408
        %v1739 = vunpack.c.0.s8 %v1738
        %v1740 = vlaneseq
        %v1741 = vshrl.u32 %v1740, 7
        %v1742 = vsub.s32 %v1739, %v1741
        %v1743 = vrot.slane %v1735, %v1742
        %v1745 = vunpack.c.l.s4 1934713408
        %v1746 = vunpack.c.0.s8 %v1745
        %v1747 = vlaneseq
        %v1748 = vshrl.u32 %v1747, 7
        %v1749 = vsub.s32 %v1746, %v1748
        %v1750 = vrot.slane %v1736, %v1749
        %v1751 = vcombine.high %v1743, 0
        %v1752 = vcombine.high %v1750, 0
        %v1755 = vpack.i.b16 %v1743, %v1709
        %v1757 = vshrl.u32 %v1709, 16
        %v1758 = vshrl.u32 %v1743, 16
        %v1759 = vpack.i.b16 %v1758, %v1757
        %v1763 = vpack.i.b16 %v1751, %v1717
        %v1765 = vshrl.u32 %v1717, 16
        %v1766 = vshrl.u32 %v1751, 16
        %v1767 = vpack.i.b16 %v1766, %v1765
        %v1771 = vpack.i.b16 %v1750, %v1716
        %v1773 = vshrl.u32 %v1716, 16
        %v1774 = vshrl.u32 %v1750, 16
        %v1775 = vpack.i.b16 %v1774, %v1773
        %v1779 = vpack.i.b16 %v1752, %v1718
        %v1781 = vshrl.u32 %v1718, 16
        %v1782 = vshrl.u32 %v1752, 16
        %v1783 = vpack.i.b16 %v1782, %v1781
        %v1785 = vcombine.low %v1755, %v1771
        %v1787 = vunpack.c.l.s4 1983009808
        %v1788 = vunpack.c.0.s8 %v1787
        %v1789 = vlaneseq
        %v1790 = vshrl.u32 %v1789, 7
        %v1791 = vsub.s32 %v1788, %v1790
        %v1792 = vrot.slane %v1785, %v1791
        %v1793 = vcombine.low %v1763, %v1779
        %v1795 = vunpack.c.l.s4 1983009808
        %v1796 = vunpack.c.0.s8 %v1795
        %v1797 = vlaneseq
        %v1798 = vshrl.u32 %v1797, 7
        %v1799 = vsub.s32 %v1796, %v1798
        %v1800 = vrot.slane %v1793, %v1799
        %v1801 = vcombine.low %v1792, %v1800
        %v1803 = vunpack.c.l.s4 1934713408
        %v1804 = vunpack.c.0.s8 %v1803
        %v1805 = vlaneseq
        %v1806 = vshrl.u32 %v1805, 7
        %v1807 = vsub.s32 %v1804, %v1806
        %v1808 = vrot.slane %v1801, %v1807
        %v1809 = vcombine.high %v1808, 0
        %v1810 = vcombine.low %v1759, %v1775
        %v1812 = vunpack.c.l.s4 1983009808
        %v1813 = vunpack.c.0.s8 %v1812
        %v1814 = vlaneseq
        %v1815 = vshrl.u32 %v1814, 7
        %v1816 = vsub.s32 %v1813, %v1815
        %v1817 = vrot.slane %v1810, %v1816
        %v1818 = vcombine.low %v1767, %v1783
        %v1820 = vunpack.c.l.s4 1983009808
        %v1821 = vunpack.c.0.s8 %v1820
        %v1822 = vlaneseq
        %v1823 = vshrl.u32 %v1822, 7
        %v1824 = vsub.s32 %v1821, %v1823
        %v1825 = vrot.slane %v1818, %v1824
        %v1826 = vcombine.low %v1817, %v1825
        %v1828 = vunpack.c.l.s4 1934713408
        %v1829 = vunpack.c.0.s8 %v1828
        %v1830 = vlaneseq
        %v1831 = vshrl.u32 %v1830, 7
        %v1832 = vsub.s32 %v1829, %v1831
        %v1833 = vrot.slane %v1826, %v1832
        %v1834 = vcombine.high %v1833, 0
        %v1837 = vpack.i.b16 %v1833, %v1808
        %v1838 = vshrl.u32 %v1808, 16
        %v1839 = vshrl.u32 %v1833, 16
        %v1840 = vpack.i.b16 %v1839, %v1838
        %v1843 = vpack.i.b16 %v1834, %v1809
        %v1844 = vshrl.u32 %v1809, 16
        %v1845 = vshrl.u32 %v1834, 16
        %v1846 = vpack.i.b16 %v1845, %v1844
        %1847 = vrot.lane.b32.xlu0 %v1840, 8
        %v1848 = vpop.permute.xlu0 %1847
        %1849 = vrot.lane.b32.xlu0 %v1843, 16
        %v1850 = vpop.permute.xlu0 %1849
        %1851 = vrot.lane.b32.xlu0 %v1846, 24
        %v1852 = vpop.permute.xlu0 %1851
        %v1855 = vsel %vm1267, %v1837, %v1848
        %vm1856 = vcmask 130048
        %v1858 = vsel %vm1856, %v1855, %v1850
        %vm1859 = vcmask 195584
        %v1861 = vsel %vm1859, %v1858, %v1852
        %v1862 = vld [vmem:[%s9] sm:$0xf]
        %v1863 = vld [vmem:[%s9 + $0x4] sm:$0xf]
        %v1864 = vld [vmem:[%s9 + $0x8] sm:$0xf]
        %v1865 = vld [vmem:[%s9 + $0xc] sm:$0xf]
        %v1866 = vld [vmem:[%s10] sm:$0x1]
        %v1868 = vlaneseq
        %v1869 = vshrl.u32 %v1868, 7
        %v1870 = vsub.s32 0, %v1869
        %v1871 = vrot.slane %v1866, %v1870
        %v1877 = vunpack.c.l.b16 %v1862
        %v1878 = vunpack.c.l.b16 %v1863
        %v1879 = vunpack.c.l.b16 %v1864
        %v1880 = vunpack.c.l.b16 %v1865
        %v1881 = vpack.c.b16 %v1878, %v1877
        %v1882 = vpack.c.b16 %v1880, %v1879
        %v1885 = vsel %vm584, %v1861, 0
        %1887 = vmatprep.subr.bf16.mxu0 0
        %1888 = vmatpush1.bf16.msra.mxu0 0
        %1889 = vmatprep.subr.bf16.mxu0 0
        %1890 = vmatpush1.bf16.msra.mxu0 0
        %1891 = vmatprep.subr.bf16.mxu0 0
        %1892 = vmatpush1.bf16.msra.mxu0 0
        %1893 = vmatprep.subr.bf16.mxu0 0
        %1894 = vmatpush1.bf16.msra.mxu0 0
        %1895 = vmatprep.subr.bf16.mxu0 0
        %1896 = vmatpush1.bf16.msra.mxu0 0
        %1897 = vmatprep.subr.bf16.mxu0 0
        %1898 = vmatpush1.bf16.msra.mxu0 0
        %1899 = vmatprep.subr.bf16.mxu0 0
        %1900 = vmatpush1.bf16.msra.mxu0 %v1882
        %1901 = vmatprep.subr.bf16.mxu0 0
        %1902 = vmatpush1.bf16.msra.mxu0 %v1881
        %1903 = vmatprep.subr.bf16.mxu0 0
        %1904 = vmatpush2.bf16.msra.mxu0 0
        %1905 = vmatprep.subr.bf16.mxu0 0
        %1906 = vmatpush2.bf16.msra.mxu0 0
        %1907 = vmatprep.subr.bf16.mxu0 0
        %1908 = vmatpush2.bf16.msra.mxu0 0
        %1909 = vmatprep.subr.bf16.mxu0 0
        %1910 = vmatpush2.bf16.msra.mxu0 0
        %1911 = vmatprep.subr.bf16.mxu0 0
        %1912 = vmatpush2.bf16.msra.mxu0 0
        %1913 = vmatprep.subr.bf16.mxu0 0
        %1914 = vmatpush2.bf16.msra.mxu0 0
        %1915 = vmatprep.subr.bf16.mxu0 0
        %1916 = vmatpush2.bf16.msra.mxu0 0
        %1917 = vmatprep.subr.bf16.mxu0 0
        %1918 = vmatpush2.bf16.msra.mxu0 0
        %1919 = vmatprep.mubr.bf16.mxu0 0
        %1920 = vmatmul.mubr.bf16.gmra.mxu0 %v1885
        %v1921 = vpop.f32.mrf.mxu0
        %v1922 = vadd.f32 %v1871, %v1921
        %v1923 = vpop.f32.mrf.mxu0
        %v1924 = vpop.f32.mrf.mxu0
        %v1925 = vpop.f32.mrf.mxu0
        %1926 = vdwg.mxu0
        %1927 = vst.msk [vmem:[%s553] sm:$0xff] %vm584, %v1922
        %s1928 = sand.u32 %s288, 1
        %s1929 = scalar_lea.sflag [#allocation4], %s1928
        %s1930 = sand.u32 %s288, 1
        %s1931 = smul.addr %s1930, 8
        %s1932 = scalar_lea.vmem [#allocation17], %s1931
        // Predicated region
        $region101: #{tpu_custom_call.1} parent=63 // pred_check
          %p1933 = pneg %p298
        $region102: #{tpu_custom_call.1} parent=63 // pred_check_branch
          %1935 = sbr.rel (%p1933) target = $region104
        $region103: #{tpu_custom_call.1} parent=63 // pred_region
          %s1937 = ssub.s32 128, 128
          %1938 = vsyncadd %s1929, %s1937
          %s1939 = smul.addr %s34, 128
          %s1940 = scalar_lea.hbm %s11, %s1939
          %s1942 = sshll.u32 %s1932, 4
          %s1943 = int_to_ptr.vmem [resolvable:$true] %s1942
          %1945 = dma.vmem_to_hbm [thread:$0]  %s1943, 128, %s1940, %s1929
        $region104: #{tpu_custom_call.1} parent=63 // pred_fallthru
          _
      $region64: #{tpu_custom_call.1} parent=5 // pred_fallthru
        _
      %p1946 = scmp.le.s32.totalorder 2, %s29
      // Predicated region
      $region105: #{tpu_custom_call.1} parent=5 // pred_check
        %p1947 = pneg %p1946
      $region106: #{tpu_custom_call.1} parent=5 // pred_check_branch
        %1949 = sbr.rel (%p1947) target = $region108
      $region107: #{tpu_custom_call.1} parent=5 // pred_region
        %s1950 = ssub.s32 %s29, 2
        // Predicated region
        $region109: #{tpu_custom_call.1} parent=107 // pred_check
          %p1951 = pneg %p304
        $region110: #{tpu_custom_call.1} parent=107 // pred_check_branch
          %1953 = sbr.rel (%p1951) target = $region112
        $region111: #{tpu_custom_call.1} parent=107 // pred_region
          %s1954 = sand.u32 %s289, 1
          %s1955 = scalar_lea.sflag [#allocation4], %s1954
          %s1956 = sand.u32 %s289, 1
          %s1957 = smul.addr %s1956, 8
          %s1958 = scalar_lea.vmem [#allocation17], %s1957
          %1959 = dma.done %s1955, 128
        $region112: #{tpu_custom_call.1} parent=107 // pred_fallthru
          _
      $region108: #{tpu_custom_call.1} parent=5 // pred_fallthru
        _
    $region6: #{tpu_custom_call.1} parent=1 // loop_footer
      %s33 = sadd.s32 1, %s29
    $region7: #{tpu_custom_call.1} parent=1 // loop_footer_branch
      %28 = sbr.rel target = $region3
    $region8: #{tpu_custom_call.1} parent=1 // loop_exit
      _
    %1960 = vsyncpa [#allocation3], 1
    %s1961 = scalar_lea.sflag [#allocation3], 1
    %1962 = vsyncpa %s1961, 1
    %1963 = vsyncpa [#allocation6], 1
    %s1964 = scalar_lea.sflag [#allocation6], 1
    %1965 = vsyncpa %s1964, 1
    %1966 = vsyncpa [#allocation9], 1
    %1967 = vsyncpa [#allocation12], 1
    %1968 = vsyncpa [#allocation15], 1
    %1969 = vsyncpa [#allocation4], 1
    %s1970 = scalar_lea.sflag [#allocation4], 1
    %1971 = vsyncpa %s1970, 1

</llo_original>
